<compile_context>
chip_gen: v6e
topology: v6e:2x2x1
jax: 0.10.0
libtpu: 0.0.40
codegen_flags: <defaults>
</compile_context>

<pallas_src>
import functools

import jax
import jax.numpy as jnp
from jax.experimental import pallas as pl
from jax.experimental.pallas import tpu as pltpu


# ----------------------------------------------------------------------------
# Fused Pallas kernel: 5x (A_hat @ h @ W + b, relu/BN) + pool + fc1 + fc2
# ----------------------------------------------------------------------------
def _fused_gnn_kernel(a_ref, x_ref, pool_ref,
                      w1, b1, s1, t1,
                      w2, b2, s2, t2,
                      w3, b3, s3, t3,
                      w4, b4,                      # layer 4: BN folded into W/b
                      w5, b5, s5, t5,
                      fw1, fb1, fw2, fb2,
                      o_ref):
    a = a_ref[...]                                 # (Np, Np)  bf16, VMEM-resident

    def gcn(h_bf16, w_ref, b_ref, scale_ref=None, shift_ref=None):
        # message passing:  A_hat @ h        -> MXU, f32 accumulate
        agg = jnp.dot(a, h_bf16, preferred_element_type=jnp.float32)
        agg = agg.astype(jnp.bfloat16)
        # linear transform: (A_hat h) @ W + b -> MXU, f32 accumulate
        z = jnp.dot(agg, w_ref[...], preferred_element_type=jnp.float32)
        z = z + b_ref[...]
        if scale_ref is None:
            # BN already folded into (W, b): plain ReLU (layer 4 path).
            z = jnp.maximum(z, 0.0)
        else:
            # relu then eval-mode BN affine (layers 1, 2, 3, 5).
            z = jnp.maximum(z, 0.0)
            z = z * scale_ref[...] + shift_ref[...]
        return z.astype(jnp.bfloat16)

    h = x_ref[...]                                 # (Np, 128) bf16
    h = gcn(h, w1, b1, s1, t1)
    h = gcn(h, w2, b2, s2, t2)
    h = gcn(h, w3, b3, s3, t3)
    h = gcn(h, w4, b4)                             # folded BN -> relu only
    h = gcn(h, w5, b5, s5, t5)                     # (Np, 256) bf16

    # global_add_pool as a tiny in-VMEM matmul, then MLP head.
    pooled = jnp.dot(pool_ref[...], h, preferred_element_type=jnp.float32)
    p = jnp.maximum(pooled, 0.0).astype(jnp.bfloat16)
    f = jnp.dot(p, fw1[...], preferred_element_type=jnp.float32) + fb1[...]
    f = jnp.maximum(f, 0.0).astype(jnp.bfloat16)
    # F.dropout(p=0.25) is identity in eval mode.
    out = jnp.dot(f, fw2[...], preferred_element_type=jnp.float32) + fb2[...]
    o_ref[...] = out                               # (Bp, 128) f32, lane-dense


def _full_spec(shape):
    return pl.BlockSpec(shape, lambda i: (0,) * len(shape))


def fused_gnn_forward(a_hat_p, x_p, pool_p, flat_params, b_pad):
    """Single pallas_call for the whole forward pass (everything in VMEM)."""
    operands = (a_hat_p, x_p, pool_p) + tuple(flat_params)
    return pl.pallas_call(
        _fused_gnn_kernel,
        out_shape=jax.ShapeDtypeStruct((b_pad, 128), jnp.float32),
        grid=(1,),
        in_specs=[_full_spec(op.shape) for op in operands],
        out_specs=_full_spec((b_pad, 128)),
        compiler_params=pltpu.CompilerParams(
            dimension_semantics=("arbitrary",),
            vmem_limit_bytes=32 * 1024 * 1024),
    )(*operands)


# ----------------------------------------------------------------------------
# Plain-JAX glue: GCN normalization (gather/scatter over edges) + pooling mat
# ----------------------------------------------------------------------------
def build_gcn_adj(edge_index, edge_weight, num_nodes):
    """Dense A_hat = D^{-1/2} (A + I) D^{-1/2}, PyG GCNConv convention."""
    src, dst = edge_index[0], edge_index[1]
    loop = jnp.arange(num_nodes, dtype=src.dtype)
    src = jnp.concatenate([src, loop])
    dst = jnp.concatenate([dst, loop])
    w = jnp.concatenate(
        [edge_weight, jnp.ones((num_nodes,), edge_weight.dtype)])
    deg = jnp.zeros((num_nodes,), w.dtype).at[dst].add(w)
    dinv = jnp.where(deg > 0, jax.lax.rsqrt(deg), 0.0)
    vals = dinv[src] * w * dinv[dst]
    # A_hat[i, j] aggregates messages j -> i
    return jnp.zeros((num_nodes, num_nodes), w.dtype).at[dst, src].add(vals)


def build_pool_matrix(batch, num_graphs):
    # pool[b, n] = 1.0 iff node n belongs to graph b  (global_add_pool)
    return jax.nn.one_hot(batch, num_graphs, dtype=jnp.float32).T


def _round_up(x, m):
    return (x + m - 1) // m * m


def _pad2(a, rows, cols):
    return jnp.pad(a, ((0, rows - a.shape[0]), (0, cols - a.shape[1])))


# ----------------------------------------------------------------------------
# Parameter construction (deterministic, mirrors GNN_LBA.__init__ shapes)
# ----------------------------------------------------------------------------
def glorot(key, shape):
    fan_in, fan_out = shape
    lim = (6.0 / (fan_in + fan_out)) ** 0.5
    return jax.random.uniform(key, shape, jnp.float32, -lim, lim)


def init_params(key, num_features, hidden_dim):
    dims = [num_features, hidden_dim, hidden_dim * 2, hidden_dim * 4,
            hidden_dim * 4, hidden_dim * 8]
    params = {"conv": [], "bn": []}
    eps = 1e-5
    for li in range(5):
        key, kw, kg, kb = jax.random.split(key, 4)
        c_in, c_out = dims[li], dims[li + 1]
        w = glorot(kw, (c_in, c_out))
        b = jnp.zeros((1, c_out), jnp.float32)
        # BatchNorm1d eval: y = gamma * (x - mean) / sqrt(var + eps) + beta
        gamma = 1.0 + 0.05 * jax.random.normal(kg, (1, c_out), jnp.float32)
        beta = 0.05 * jax.random.normal(kb, (1, c_out), jnp.float32)
        running_mean = jnp.zeros((1, c_out), jnp.float32)
        running_var = jnp.ones((1, c_out), jnp.float32)
        scale = gamma * jax.lax.rsqrt(running_var + eps)
        shift = beta - running_mean * scale
        params["conv"].append((w, b))
        params["bn"].append((scale, shift))
    key, k1, k2 = jax.random.split(key, 3)
    params["fc1"] = (glorot(k1, (hidden_dim * 8, hidden_dim * 4)),
                     jnp.zeros((1, hidden_dim * 4), jnp.float32))
    params["fc2"] = (glorot(k2, (hidden_dim * 4, 1)),
                     jnp.zeros((1, 1), jnp.float32))
    return params


def pack_padded_params(params):
    """Pad all params to 128-lane-aligned shapes, cast W's to bf16, and fold
    layer 4's BN affine into its (W, b)."""
    flat = []
    for li in range(5):
        w, b = params["conv"][li]
        scale, shift = params["bn"][li]
        if li == 3:
            # layer 4: x = relu(bn(conv(x))) -> fold scale/shift into W, b.
            w = w * scale                      # broadcast over rows
            b = b * scale + shift
            scale, shift = None, None
        cin_p = _round_up(w.shape[0], 128)
        cout_p = _round_up(w.shape[1], 128)
        flat.append(_pad2(w, cin_p, cout_p).astype(jnp.bfloat16))
        flat.append(_pad2(b, 1, cout_p))                       # f32
        if scale is not None:
            flat.append(_pad2(scale, 1, cout_p))               # f32
            flat.append(_pad2(shift, 1, cout_p))               # f32
    w1, b1 = params["fc1"]
    w2, b2 = params["fc2"]
    flat.append(_pad2(w1, _round_up(w1.shape[0], 128),
                      _round_up(w1.shape[1], 128)).astype(jnp.bfloat16))
    flat.append(_pad2(b1, 1, _round_up(w1.shape[1], 128)))
    flat.append(_pad2(w2, _round_up(w2.shape[0], 128), 128).astype(jnp.bfloat16))
    flat.append(_pad2(b2, 1, 128))
    return flat


# ----------------------------------------------------------------------------
# Full forward (matches GNN_LBA.forward, eval mode)
# ----------------------------------------------------------------------------
def gnn_lba_forward(params, x, edge_index, edge_weight, batch, num_graphs):
    n, c0 = x.shape
    n_pad = _round_up(max(n, 8), 128)
    c0_pad = _round_up(c0, 128)
    b_pad = _round_up(max(num_graphs, 8), 8)

    a_hat = build_gcn_adj(edge_index, edge_weight, n)           # f32 (N, N)
    a_hat_p = _pad2(a_hat, n_pad, n_pad).astype(jnp.bfloat16)
    x_p = _pad2(x, n_pad, c0_pad).astype(jnp.bfloat16)
    pool = build_pool_matrix(batch, num_graphs)                 # (B, N)
    pool_p = _pad2(pool, b_pad, n_pad).astype(jnp.bfloat16)

    flat_params = pack_padded_params(params)
    out = fused_gnn_forward(a_hat_p, x_p, pool_p, flat_params, b_pad)
    # lane-dense (Bp, 128) output; real result lives in column 0, rows :B
    return out[:num_graphs, 0]                                  # .view(-1)


if __name__ == "__main__":
    num_features = 16
    hidden_dim = 32
    num_nodes = 32
    num_edges = 64
    num_graphs = 2

    key = jax.random.PRNGKey(0)
    kx, ke, kw, kp = jax.random.split(key, 4)

    x = jax.random.normal(kx, (num_nodes, num_features), jnp.float32)
    edge_index = jax.random.randint(ke, (2, num_edges), 0, num_nodes,
                                    dtype=jnp.int32)
    edge_weight = jax.random.uniform(kw, (num_edges,), jnp.float32, 0.1, 1.0)
    # first half of nodes -> graph 0, second half -> graph 1
    batch = jnp.concatenate([
        jnp.zeros((num_nodes // 2,), jnp.int32),
        jnp.ones((num_nodes - num_nodes // 2,), jnp.int32)])

    params = init_params(kp, num_features, hidden_dim)

    out = gnn_lba_forward(params, x, edge_index, edge_weight, batch,
                          num_graphs)
    jax.block_until_ready(out)
    assert out.shape == (num_graphs,)
    assert bool(jnp.all(jnp.isfinite(out)))
    print("KERNEL_OK")
</pallas_src>

<mosaic_0001>
module attributes {stable_mosaic.version = 11 : i64} {
  func.func @_fused_gnn_kernel(%arg0: i32, %arg1: memref<128x128xbf16, #tpu.memory_space<vmem>>, %arg2: memref<128x128xbf16, #tpu.memory_space<vmem>>, %arg3: memref<8x128xbf16, #tpu.memory_space<vmem>>, %arg4: memref<128x128xbf16, #tpu.memory_space<vmem>>, %arg5: memref<1x128xf32, #tpu.memory_space<vmem>>, %arg6: memref<1x128xf32, #tpu.memory_space<vmem>>, %arg7: memref<1x128xf32, #tpu.memory_space<vmem>>, %arg8: memref<128x128xbf16, #tpu.memory_space<vmem>>, %arg9: memref<1x128xf32, #tpu.memory_space<vmem>>, %arg10: memref<1x128xf32, #tpu.memory_space<vmem>>, %arg11: memref<1x128xf32, #tpu.memory_space<vmem>>, %arg12: memref<128x128xbf16, #tpu.memory_space<vmem>>, %arg13: memref<1x128xf32, #tpu.memory_space<vmem>>, %arg14: memref<1x128xf32, #tpu.memory_space<vmem>>, %arg15: memref<1x128xf32, #tpu.memory_space<vmem>>, %arg16: memref<128x128xbf16, #tpu.memory_space<vmem>>, %arg17: memref<1x128xf32, #tpu.memory_space<vmem>>, %arg18: memref<128x256xbf16, #tpu.memory_space<vmem>>, %arg19: memref<1x256xf32, #tpu.memory_space<vmem>>, %arg20: memref<1x256xf32, #tpu.memory_space<vmem>>, %arg21: memref<1x256xf32, #tpu.memory_space<vmem>>, %arg22: memref<256x128xbf16, #tpu.memory_space<vmem>>, %arg23: memref<1x128xf32, #tpu.memory_space<vmem>>, %arg24: memref<128x128xbf16, #tpu.memory_space<vmem>>, %arg25: memref<1x128xf32, #tpu.memory_space<vmem>>, %arg26: memref<8x128xf32, #tpu.memory_space<vmem>>) attributes {dimension_semantics = [#tpu.dimension_semantics<arbitrary>], iteration_bounds = array<i64: 1>, scalar_prefetch = 0 : i64, scratch_operands = 0 : i64, tpu.core_type = #tpu.core_type<tc>, window_params = [{pipeline_mode = #tpu.pipeline_mode<synchronous>, transform_indices = @transform_0, window_bounds = array<i64: 128, 128>}, {pipeline_mode = #tpu.pipeline_mode<synchronous>, transform_indices = @transform_1, window_bounds = array<i64: 128, 128>}, {pipeline_mode = #tpu.pipeline_mode<synchronous>, transform_indices = @transform_2, window_bounds = array<i64: 8, 128>}, {pipeline_mode = #tpu.pipeline_mode<synchronous>, transform_indices = @transform_3, window_bounds = array<i64: 128, 128>}, {pipeline_mode = #tpu.pipeline_mode<synchronous>, transform_indices = @transform_4, window_bounds = array<i64: 1, 128>}, {pipeline_mode = #tpu.pipeline_mode<synchronous>, transform_indices = @transform_5, window_bounds = array<i64: 1, 128>}, {pipeline_mode = #tpu.pipeline_mode<synchronous>, transform_indices = @transform_6, window_bounds = array<i64: 1, 128>}, {pipeline_mode = #tpu.pipeline_mode<synchronous>, transform_indices = @transform_7, window_bounds = array<i64: 128, 128>}, {pipeline_mode = #tpu.pipeline_mode<synchronous>, transform_indices = @transform_8, window_bounds = array<i64: 1, 128>}, {pipeline_mode = #tpu.pipeline_mode<synchronous>, transform_indices = @transform_9, window_bounds = array<i64: 1, 128>}, {pipeline_mode = #tpu.pipeline_mode<synchronous>, transform_indices = @transform_10, window_bounds = array<i64: 1, 128>}, {pipeline_mode = #tpu.pipeline_mode<synchronous>, transform_indices = @transform_11, window_bounds = array<i64: 128, 128>}, {pipeline_mode = #tpu.pipeline_mode<synchronous>, transform_indices = @transform_12, window_bounds = array<i64: 1, 128>}, {pipeline_mode = #tpu.pipeline_mode<synchronous>, transform_indices = @transform_13, window_bounds = array<i64: 1, 128>}, {pipeline_mode = #tpu.pipeline_mode<synchronous>, transform_indices = @transform_14, window_bounds = array<i64: 1, 128>}, {pipeline_mode = #tpu.pipeline_mode<synchronous>, transform_indices = @transform_15, window_bounds = array<i64: 128, 128>}, {pipeline_mode = #tpu.pipeline_mode<synchronous>, transform_indices = @transform_16, window_bounds = array<i64: 1, 128>}, {pipeline_mode = #tpu.pipeline_mode<synchronous>, transform_indices = @transform_17, window_bounds = array<i64: 128, 256>}, {pipeline_mode = #tpu.pipeline_mode<synchronous>, transform_indices = @transform_18, window_bounds = array<i64: 1, 256>}, {pipeline_mode = #tpu.pipeline_mode<synchronous>, transform_indices = @transform_19, window_bounds = array<i64: 1, 256>}, {pipeline_mode = #tpu.pipeline_mode<synchronous>, transform_indices = @transform_20, window_bounds = array<i64: 1, 256>}, {pipeline_mode = #tpu.pipeline_mode<synchronous>, transform_indices = @transform_21, window_bounds = array<i64: 256, 128>}, {pipeline_mode = #tpu.pipeline_mode<synchronous>, transform_indices = @transform_22, window_bounds = array<i64: 1, 128>}, {pipeline_mode = #tpu.pipeline_mode<synchronous>, transform_indices = @transform_23, window_bounds = array<i64: 128, 128>}, {pipeline_mode = #tpu.pipeline_mode<synchronous>, transform_indices = @transform_24, window_bounds = array<i64: 1, 128>}, {pipeline_mode = #tpu.pipeline_mode<synchronous>, transform_indices = @transform_25, window_bounds = array<i64: 8, 128>}]} {
    %c0 = arith.constant 0 : index
    %c0_0 = arith.constant 0 : index
    %0 = vector.load %arg1[%c0, %c0_0] : memref<128x128xbf16, #tpu.memory_space<vmem>>, vector<128x128xbf16>
    %c0_1 = arith.constant 0 : index
    %c0_2 = arith.constant 0 : index
    %1 = vector.load %arg2[%c0_1, %c0_2] : memref<128x128xbf16, #tpu.memory_space<vmem>>, vector<128x128xbf16>
    %cst = arith.constant dense<0.000000e+00> : vector<128x128xf32>
    %2 = tpu.matmul %0, %1, %cst {dimension_numbers = #tpu.dot_dimension_numbers<[1], [0], [0], [1], [0, 0, 1, 1], [], []>} : vector<128x128xbf16>, vector<128x128xbf16>, vector<128x128xf32> -> vector<128x128xf32>
    %3 = arith.truncf %2 : vector<128x128xf32> to vector<128x128xbf16>
    %c0_3 = arith.constant 0 : index
    %c0_4 = arith.constant 0 : index
    %4 = vector.load %arg4[%c0_3, %c0_4] : memref<128x128xbf16, #tpu.memory_space<vmem>>, vector<128x128xbf16>
    %cst_5 = arith.constant dense<0.000000e+00> : vector<128x128xf32>
    %5 = tpu.matmul %3, %4, %cst_5 {dimension_numbers = #tpu.dot_dimension_numbers<[1], [0], [0], [1], [0, 0, 1, 1], [], []>} : vector<128x128xbf16>, vector<128x128xbf16>, vector<128x128xf32> -> vector<128x128xf32>
    %c0_6 = arith.constant 0 : index
    %c0_7 = arith.constant 0 : index
    %6 = vector.load %arg5[%c0_6, %c0_7] : memref<1x128xf32, #tpu.memory_space<vmem>>, vector<1x128xf32>
    %7 = vector.broadcast %6 : vector<1x128xf32> to vector<128x128xf32>
    %8 = arith.addf %5, %7 : vector<128x128xf32>
    %cst_8 = arith.constant 0.000000e+00 : f32
    %9 = vector.broadcast %cst_8 : f32 to vector<128x128xf32>
    %10 = arith.maximumf %8, %9 : vector<128x128xf32>
    %c0_9 = arith.constant 0 : index
    %c0_10 = arith.constant 0 : index
    %11 = vector.load %arg6[%c0_9, %c0_10] : memref<1x128xf32, #tpu.memory_space<vmem>>, vector<1x128xf32>
    %12 = vector.broadcast %11 : vector<1x128xf32> to vector<128x128xf32>
    %13 = arith.mulf %10, %12 : vector<128x128xf32>
    %c0_11 = arith.constant 0 : index
    %c0_12 = arith.constant 0 : index
    %14 = vector.load %arg7[%c0_11, %c0_12] : memref<1x128xf32, #tpu.memory_space<vmem>>, vector<1x128xf32>
    %15 = vector.broadcast %14 : vector<1x128xf32> to vector<128x128xf32>
    %16 = arith.addf %13, %15 : vector<128x128xf32>
    %17 = arith.truncf %16 : vector<128x128xf32> to vector<128x128xbf16>
    %cst_13 = arith.constant dense<0.000000e+00> : vector<128x128xf32>
    %18 = tpu.matmul %0, %17, %cst_13 {dimension_numbers = #tpu.dot_dimension_numbers<[1], [0], [0], [1], [0, 0, 1, 1], [], []>} : vector<128x128xbf16>, vector<128x128xbf16>, vector<128x128xf32> -> vector<128x128xf32>
    %19 = arith.truncf %18 : vector<128x128xf32> to vector<128x128xbf16>
    %c0_14 = arith.constant 0 : index
    %c0_15 = arith.constant 0 : index
    %20 = vector.load %arg8[%c0_14, %c0_15] : memref<128x128xbf16, #tpu.memory_space<vmem>>, vector<128x128xbf16>
    %cst_16 = arith.constant dense<0.000000e+00> : vector<128x128xf32>
    %21 = tpu.matmul %19, %20, %cst_16 {dimension_numbers = #tpu.dot_dimension_numbers<[1], [0], [0], [1], [0, 0, 1, 1], [], []>} : vector<128x128xbf16>, vector<128x128xbf16>, vector<128x128xf32> -> vector<128x128xf32>
    %c0_17 = arith.constant 0 : index
    %c0_18 = arith.constant 0 : index
    %22 = vector.load %arg9[%c0_17, %c0_18] : memref<1x128xf32, #tpu.memory_space<vmem>>, vector<1x128xf32>
    %23 = vector.broadcast %22 : vector<1x128xf32> to vector<128x128xf32>
    %24 = arith.addf %21, %23 : vector<128x128xf32>
    %cst_19 = arith.constant 0.000000e+00 : f32
    %25 = vector.broadcast %cst_19 : f32 to vector<128x128xf32>
    %26 = arith.maximumf %24, %25 : vector<128x128xf32>
    %c0_20 = arith.constant 0 : index
    %c0_21 = arith.constant 0 : index
    %27 = vector.load %arg10[%c0_20, %c0_21] : memref<1x128xf32, #tpu.memory_space<vmem>>, vector<1x128xf32>
    %28 = vector.broadcast %27 : vector<1x128xf32> to vector<128x128xf32>
    %29 = arith.mulf %26, %28 : vector<128x128xf32>
    %c0_22 = arith.constant 0 : index
    %c0_23 = arith.constant 0 : index
    %30 = vector.load %arg11[%c0_22, %c0_23] : memref<1x128xf32, #tpu.memory_space<vmem>>, vector<1x128xf32>
    %31 = vector.broadcast %30 : vector<1x128xf32> to vector<128x128xf32>
    %32 = arith.addf %29, %31 : vector<128x128xf32>
    %33 = arith.truncf %32 : vector<128x128xf32> to vector<128x128xbf16>
    %cst_24 = arith.constant dense<0.000000e+00> : vector<128x128xf32>
    %34 = tpu.matmul %0, %33, %cst_24 {dimension_numbers = #tpu.dot_dimension_numbers<[1], [0], [0], [1], [0, 0, 1, 1], [], []>} : vector<128x128xbf16>, vector<128x128xbf16>, vector<128x128xf32> -> vector<128x128xf32>
    %35 = arith.truncf %34 : vector<128x128xf32> to vector<128x128xbf16>
    %c0_25 = arith.constant 0 : index
    %c0_26 = arith.constant 0 : index
    %36 = vector.load %arg12[%c0_25, %c0_26] : memref<128x128xbf16, #tpu.memory_space<vmem>>, vector<128x128xbf16>
    %cst_27 = arith.constant dense<0.000000e+00> : vector<128x128xf32>
    %37 = tpu.matmul %35, %36, %cst_27 {dimension_numbers = #tpu.dot_dimension_numbers<[1], [0], [0], [1], [0, 0, 1, 1], [], []>} : vector<128x128xbf16>, vector<128x128xbf16>, vector<128x128xf32> -> vector<128x128xf32>
    %c0_28 = arith.constant 0 : index
    %c0_29 = arith.constant 0 : index
    %38 = vector.load %arg13[%c0_28, %c0_29] : memref<1x128xf32, #tpu.memory_space<vmem>>, vector<1x128xf32>
    %39 = vector.broadcast %38 : vector<1x128xf32> to vector<128x128xf32>
    %40 = arith.addf %37, %39 : vector<128x128xf32>
    %cst_30 = arith.constant 0.000000e+00 : f32
    %41 = vector.broadcast %cst_30 : f32 to vector<128x128xf32>
    %42 = arith.maximumf %40, %41 : vector<128x128xf32>
    %c0_31 = arith.constant 0 : index
    %c0_32 = arith.constant 0 : index
    %43 = vector.load %arg14[%c0_31, %c0_32] : memref<1x128xf32, #tpu.memory_space<vmem>>, vector<1x128xf32>
    %44 = vector.broadcast %43 : vector<1x128xf32> to vector<128x128xf32>
    %45 = arith.mulf %42, %44 : vector<128x128xf32>
    %c0_33 = arith.constant 0 : index
    %c0_34 = arith.constant 0 : index
    %46 = vector.load %arg15[%c0_33, %c0_34] : memref<1x128xf32, #tpu.memory_space<vmem>>, vector<1x128xf32>
    %47 = vector.broadcast %46 : vector<1x128xf32> to vector<128x128xf32>
    %48 = arith.addf %45, %47 : vector<128x128xf32>
    %49 = arith.truncf %48 : vector<128x128xf32> to vector<128x128xbf16>
    %cst_35 = arith.constant dense<0.000000e+00> : vector<128x128xf32>
    %50 = tpu.matmul %0, %49, %cst_35 {dimension_numbers = #tpu.dot_dimension_numbers<[1], [0], [0], [1], [0, 0, 1, 1], [], []>} : vector<128x128xbf16>, vector<128x128xbf16>, vector<128x128xf32> -> vector<128x128xf32>
    %51 = arith.truncf %50 : vector<128x128xf32> to vector<128x128xbf16>
    %c0_36 = arith.constant 0 : index
    %c0_37 = arith.constant 0 : index
    %52 = vector.load %arg16[%c0_36, %c0_37] : memref<128x128xbf16, #tpu.memory_space<vmem>>, vector<128x128xbf16>
    %cst_38 = arith.constant dense<0.000000e+00> : vector<128x128xf32>
    %53 = tpu.matmul %51, %52, %cst_38 {dimension_numbers = #tpu.dot_dimension_numbers<[1], [0], [0], [1], [0, 0, 1, 1], [], []>} : vector<128x128xbf16>, vector<128x128xbf16>, vector<128x128xf32> -> vector<128x128xf32>
    %c0_39 = arith.constant 0 : index
    %c0_40 = arith.constant 0 : index
    %54 = vector.load %arg17[%c0_39, %c0_40] : memref<1x128xf32, #tpu.memory_space<vmem>>, vector<1x128xf32>
    %55 = vector.broadcast %54 : vector<1x128xf32> to vector<128x128xf32>
    %56 = arith.addf %53, %55 : vector<128x128xf32>
    %cst_41 = arith.constant 0.000000e+00 : f32
    %57 = vector.broadcast %cst_41 : f32 to vector<128x128xf32>
    %58 = arith.maximumf %56, %57 : vector<128x128xf32>
    %59 = arith.truncf %58 : vector<128x128xf32> to vector<128x128xbf16>
    %cst_42 = arith.constant dense<0.000000e+00> : vector<128x128xf32>
    %60 = tpu.matmul %0, %59, %cst_42 {dimension_numbers = #tpu.dot_dimension_numbers<[1], [0], [0], [1], [0, 0, 1, 1], [], []>} : vector<128x128xbf16>, vector<128x128xbf16>, vector<128x128xf32> -> vector<128x128xf32>
    %61 = arith.truncf %60 : vector<128x128xf32> to vector<128x128xbf16>
    %c0_43 = arith.constant 0 : index
    %c0_44 = arith.constant 0 : index
    %62 = vector.load %arg18[%c0_43, %c0_44] : memref<128x256xbf16, #tpu.memory_space<vmem>>, vector<128x256xbf16>
    %cst_45 = arith.constant dense<0.000000e+00> : vector<128x256xf32>
    %63 = tpu.matmul %61, %62, %cst_45 {dimension_numbers = #tpu.dot_dimension_numbers<[1], [0], [0], [1], [0, 0, 1, 1], [], []>} : vector<128x128xbf16>, vector<128x256xbf16>, vector<128x256xf32> -> vector<128x256xf32>
    %c0_46 = arith.constant 0 : index
    %c0_47 = arith.constant 0 : index
    %64 = vector.load %arg19[%c0_46, %c0_47] : memref<1x256xf32, #tpu.memory_space<vmem>>, vector<1x256xf32>
    %65 = vector.broadcast %64 : vector<1x256xf32> to vector<128x256xf32>
    %66 = arith.addf %63, %65 : vector<128x256xf32>
    %cst_48 = arith.constant 0.000000e+00 : f32
    %67 = vector.broadcast %cst_48 : f32 to vector<128x256xf32>
    %68 = arith.maximumf %66, %67 : vector<128x256xf32>
    %c0_49 = arith.constant 0 : index
    %c0_50 = arith.constant 0 : index
    %69 = vector.load %arg20[%c0_49, %c0_50] : memref<1x256xf32, #tpu.memory_space<vmem>>, vector<1x256xf32>
    %70 = vector.broadcast %69 : vector<1x256xf32> to vector<128x256xf32>
    %71 = arith.mulf %68, %70 : vector<128x256xf32>
    %c0_51 = arith.constant 0 : index
    %c0_52 = arith.constant 0 : index
    %72 = vector.load %arg21[%c0_51, %c0_52] : memref<1x256xf32, #tpu.memory_space<vmem>>, vector<1x256xf32>
    %73 = vector.broadcast %72 : vector<1x256xf32> to vector<128x256xf32>
    %74 = arith.addf %71, %73 : vector<128x256xf32>
    %75 = arith.truncf %74 : vector<128x256xf32> to vector<128x256xbf16>
    %c0_53 = arith.constant 0 : index
    %c0_54 = arith.constant 0 : index
    %76 = vector.load %arg3[%c0_53, %c0_54] : memref<8x128xbf16, #tpu.memory_space<vmem>>, vector<8x128xbf16>
    %cst_55 = arith.constant dense<0.000000e+00> : vector<8x256xf32>
    %77 = tpu.matmul %76, %75, %cst_55 {dimension_numbers = #tpu.dot_dimension_numbers<[1], [0], [0], [1], [0, 0, 1, 1], [], []>} : vector<8x128xbf16>, vector<128x256xbf16>, vector<8x256xf32> -> vector<8x256xf32>
    %cst_56 = arith.constant 0.000000e+00 : f32
    %78 = vector.broadcast %cst_56 : f32 to vector<8x256xf32>
    %79 = arith.maximumf %77, %78 : vector<8x256xf32>
    %80 = arith.truncf %79 : vector<8x256xf32> to vector<8x256xbf16>
    %c0_57 = arith.constant 0 : index
    %c0_58 = arith.constant 0 : index
    %81 = vector.load %arg22[%c0_57, %c0_58] : memref<256x128xbf16, #tpu.memory_space<vmem>>, vector<256x128xbf16>
    %cst_59 = arith.constant dense<0.000000e+00> : vector<8x128xf32>
    %82 = tpu.matmul %80, %81, %cst_59 {dimension_numbers = #tpu.dot_dimension_numbers<[1], [0], [0], [1], [0, 0, 1, 1], [], []>} : vector<8x256xbf16>, vector<256x128xbf16>, vector<8x128xf32> -> vector<8x128xf32>
    %c0_60 = arith.constant 0 : index
    %c0_61 = arith.constant 0 : index
    %83 = vector.load %arg23[%c0_60, %c0_61] : memref<1x128xf32, #tpu.memory_space<vmem>>, vector<1x128xf32>
    %84 = vector.broadcast %83 : vector<1x128xf32> to vector<8x128xf32>
    %85 = arith.addf %82, %84 : vector<8x128xf32>
    %cst_62 = arith.constant 0.000000e+00 : f32
    %86 = vector.broadcast %cst_62 : f32 to vector<8x128xf32>
    %87 = arith.maximumf %85, %86 : vector<8x128xf32>
    %88 = arith.truncf %87 : vector<8x128xf32> to vector<8x128xbf16>
    %c0_63 = arith.constant 0 : index
    %c0_64 = arith.constant 0 : index
    %89 = vector.load %arg24[%c0_63, %c0_64] : memref<128x128xbf16, #tpu.memory_space<vmem>>, vector<128x128xbf16>
    %cst_65 = arith.constant dense<0.000000e+00> : vector<8x128xf32>
    %90 = tpu.matmul %88, %89, %cst_65 {dimension_numbers = #tpu.dot_dimension_numbers<[1], [0], [0], [1], [0, 0, 1, 1], [], []>} : vector<8x128xbf16>, vector<128x128xbf16>, vector<8x128xf32> -> vector<8x128xf32>
    %c0_66 = arith.constant 0 : index
    %c0_67 = arith.constant 0 : index
    %91 = vector.load %arg25[%c0_66, %c0_67] : memref<1x128xf32, #tpu.memory_space<vmem>>, vector<1x128xf32>
    %92 = vector.broadcast %91 : vector<1x128xf32> to vector<8x128xf32>
    %93 = arith.addf %90, %92 : vector<8x128xf32>
    %c0_68 = arith.constant 0 : index
    %c0_69 = arith.constant 0 : index
    %94 = vector.load %arg26[%c0_68, %c0_69] : memref<8x128xf32, #tpu.memory_space<vmem>>, vector<8x128xf32>
    tpu.vector_store %arg26[%c0_68, %c0_69], %93 {strides = array<i32>} : memref<8x128xf32, #tpu.memory_space<vmem>>, vector<8x128xf32>,
    return
  }
  func.func @transform_0(%arg0: i32) -> (i32, i32) {
    %c0_i32 = arith.constant 0 : i32
    %c0_i32_0 = arith.constant 0 : i32
    %c0_i32_1 = arith.constant 0 : i32
    return %c0_i32, %c0_i32_0 : i32, i32
  }
  func.func @transform_1(%arg0: i32) -> (i32, i32) {
    %c0_i32 = arith.constant 0 : i32
    %c0_i32_0 = arith.constant 0 : i32
    %c0_i32_1 = arith.constant 0 : i32
    return %c0_i32, %c0_i32_0 : i32, i32
  }
  func.func @transform_2(%arg0: i32) -> (i32, i32) {
    %c0_i32 = arith.constant 0 : i32
    %c0_i32_0 = arith.constant 0 : i32
    %c0_i32_1 = arith.constant 0 : i32
    return %c0_i32, %c0_i32_0 : i32, i32
  }
  func.func @transform_3(%arg0: i32) -> (i32, i32) {
    %c0_i32 = arith.constant 0 : i32
    %c0_i32_0 = arith.constant 0 : i32
    %c0_i32_1 = arith.constant 0 : i32
    return %c0_i32, %c0_i32_0 : i32, i32
  }
  func.func @transform_4(%arg0: i32) -> (i32, i32) {
    %c0_i32 = arith.constant 0 : i32
    %c0_i32_0 = arith.constant 0 : i32
    %c0_i32_1 = arith.constant 0 : i32
    return %c0_i32, %c0_i32_0 : i32, i32
  }
  func.func @transform_5(%arg0: i32) -> (i32, i32) {
    %c0_i32 = arith.constant 0 : i32
    %c0_i32_0 = arith.constant 0 : i32
    %c0_i32_1 = arith.constant 0 : i32
    return %c0_i32, %c0_i32_0 : i32, i32
  }
  func.func @transform_6(%arg0: i32) -> (i32, i32) {
    %c0_i32 = arith.constant 0 : i32
    %c0_i32_0 = arith.constant 0 : i32
    %c0_i32_1 = arith.constant 0 : i32
    return %c0_i32, %c0_i32_0 : i32, i32
  }
  func.func @transform_7(%arg0: i32) -> (i32, i32) {
    %c0_i32 = arith.constant 0 : i32
    %c0_i32_0 = arith.constant 0 : i32
    %c0_i32_1 = arith.constant 0 : i32
    return %c0_i32, %c0_i32_0 : i32, i32
  }
  func.func @transform_8(%arg0: i32) -> (i32, i32) {
    %c0_i32 = arith.constant 0 : i32
    %c0_i32_0 = arith.constant 0 : i32
    %c0_i32_1 = arith.constant 0 : i32
    return %c0_i32, %c0_i32_0 : i32, i32
  }
  func.func @transform_9(%arg0: i32) -> (i32, i32) {
    %c0_i32 = arith.constant 0 : i32
    %c0_i32_0 = arith.constant 0 : i32
    %c0_i32_1 = arith.constant 0 : i32
    return %c0_i32, %c0_i32_0 : i32, i32
  }
  func.func @transform_10(%arg0: i32) -> (i32, i32) {
    %c0_i32 = arith.constant 0 : i32
    %c0_i32_0 = arith.constant 0 : i32
    %c0_i32_1 = arith.constant 0 : i32
    return %c0_i32, %c0_i32_0 : i32, i32
  }
  func.func @transform_11(%arg0: i32) -> (i32, i32) {
    %c0_i32 = arith.constant 0 : i32
    %c0_i32_0 = arith.constant 0 : i32
    %c0_i32_1 = arith.constant 0 : i32
    return %c0_i32, %c0_i32_0 : i32, i32
  }
  func.func @transform_12(%arg0: i32) -> (i32, i32) {
    %c0_i32 = arith.constant 0 : i32
    %c0_i32_0 = arith.constant 0 : i32
    %c0_i32_1 = arith.constant 0 : i32
    return %c0_i32, %c0_i32_0 : i32, i32
  }
  func.func @transform_13(%arg0: i32) -> (i32, i32) {
    %c0_i32 = arith.constant 0 : i32
    %c0_i32_0 = arith.constant 0 : i32
    %c0_i32_1 = arith.constant 0 : i32
    return %c0_i32, %c0_i32_0 : i32, i32
  }
  func.func @transform_14(%arg0: i32) -> (i32, i32) {
    %c0_i32 = arith.constant 0 : i32
    %c0_i32_0 = arith.constant 0 : i32
    %c0_i32_1 = arith.constant 0 : i32
    return %c0_i32, %c0_i32_0 : i32, i32
  }
  func.func @transform_15(%arg0: i32) -> (i32, i32) {
    %c0_i32 = arith.constant 0 : i32
    %c0_i32_0 = arith.constant 0 : i32
    %c0_i32_1 = arith.constant 0 : i32
    return %c0_i32, %c0_i32_0 : i32, i32
  }
  func.func @transform_16(%arg0: i32) -> (i32, i32) {
    %c0_i32 = arith.constant 0 : i32
    %c0_i32_0 = arith.constant 0 : i32
    %c0_i32_1 = arith.constant 0 : i32
    return %c0_i32, %c0_i32_0 : i32, i32
  }
  func.func @transform_17(%arg0: i32) -> (i32, i32) {
    %c0_i32 = arith.constant 0 : i32
    %c0_i32_0 = arith.constant 0 : i32
    %c0_i32_1 = arith.constant 0 : i32
    return %c0_i32, %c0_i32_0 : i32, i32
  }
  func.func @transform_18(%arg0: i32) -> (i32, i32) {
    %c0_i32 = arith.constant 0 : i32
    %c0_i32_0 = arith.constant 0 : i32
    %c0_i32_1 = arith.constant 0 : i32
    return %c0_i32, %c0_i32_0 : i32, i32
  }
  func.func @transform_19(%arg0: i32) -> (i32, i32) {
    %c0_i32 = arith.constant 0 : i32
    %c0_i32_0 = arith.constant 0 : i32
    %c0_i32_1 = arith.constant 0 : i32
    return %c0_i32, %c0_i32_0 : i32, i32
  }
  func.func @transform_20(%arg0: i32) -> (i32, i32) {
    %c0_i32 = arith.constant 0 : i32
    %c0_i32_0 = arith.constant 0 : i32
    %c0_i32_1 = arith.constant 0 : i32
    return %c0_i32, %c0_i32_0 : i32, i32
  }
  func.func @transform_21(%arg0: i32) -> (i32, i32) {
    %c0_i32 = arith.constant 0 : i32
    %c0_i32_0 = arith.constant 0 : i32
    %c0_i32_1 = arith.constant 0 : i32
    return %c0_i32, %c0_i32_0 : i32, i32
  }
  func.func @transform_22(%arg0: i32) -> (i32, i32) {
    %c0_i32 = arith.constant 0 : i32
    %c0_i32_0 = arith.constant 0 : i32
    %c0_i32_1 = arith.constant 0 : i32
    return %c0_i32, %c0_i32_0 : i32, i32
  }
  func.func @transform_23(%arg0: i32) -> (i32, i32) {
    %c0_i32 = arith.constant 0 : i32
    %c0_i32_0 = arith.constant 0 : i32
    %c0_i32_1 = arith.constant 0 : i32
    return %c0_i32, %c0_i32_0 : i32, i32
  }
  func.func @transform_24(%arg0: i32) -> (i32, i32) {
    %c0_i32 = arith.constant 0 : i32
    %c0_i32_0 = arith.constant 0 : i32
    %c0_i32_1 = arith.constant 0 : i32
    return %c0_i32, %c0_i32_0 : i32, i32
  }
  func.func @transform_25(%arg0: i32) -> (i32, i32) {
    %c0_i32 = arith.constant 0 : i32
    %c0_i32_0 = arith.constant 0 : i32
    %c0_i32_1 = arith.constant 0 : i32
    return %c0_i32, %c0_i32_0 : i32, i32
  }
}

</mosaic_0001>

<llo_original>
// kernel: tpu_custom_call.1
$region0: #{tpu_custom_call.1}
  #allocation0 [shape = 'u32[]', space=smem, size = 0x4, offset = 0x4, fixed_abs, tag = 'smem constant byte address 0x4 - core index']
  #allocation1 [shape = 'u32[144,128]{1,0:T(1,128)}', space=vmem, size = 0x12000, scoped, tag = 'internal scratch']
  %s0 = inlined_call_operand.hbm [shape: bf16[128,128], index: 0, kind: input, shape index: {}]
  %s1 = inlined_call_operand.hbm [shape: bf16[128,128], index: 1, kind: input, shape index: {}]
  %s2 = inlined_call_operand.hbm [shape: bf16[8,128], index: 2, kind: input, shape index: {}]
  %s3 = inlined_call_operand.hbm [shape: bf16[128,128], index: 3, kind: input, shape index: {}]
  %s4 = inlined_call_operand.vmem [shape: f32[1,128], index: 4, kind: input, shape index: {}]
  %s5 = inlined_call_operand.vmem [shape: f32[1,128], index: 5, kind: input, shape index: {}]
  %s6 = inlined_call_operand.vmem [shape: f32[1,128], index: 6, kind: input, shape index: {}]
  %s7 = inlined_call_operand.hbm [shape: bf16[128,128], index: 7, kind: input, shape index: {}]
  %s8 = inlined_call_operand.vmem [shape: f32[1,128], index: 8, kind: input, shape index: {}]
  %s9 = inlined_call_operand.vmem [shape: f32[1,128], index: 9, kind: input, shape index: {}]
  %s10 = inlined_call_operand.vmem [shape: f32[1,128], index: 10, kind: input, shape index: {}]
  %s11 = inlined_call_operand.hbm [shape: bf16[128,128], index: 11, kind: input, shape index: {}]
  %s12 = inlined_call_operand.vmem [shape: f32[1,128], index: 12, kind: input, shape index: {}]
  %s13 = inlined_call_operand.vmem [shape: f32[1,128], index: 13, kind: input, shape index: {}]
  %s14 = inlined_call_operand.vmem [shape: f32[1,128], index: 14, kind: input, shape index: {}]
  %s15 = inlined_call_operand.hbm [shape: bf16[128,128], index: 15, kind: input, shape index: {}]
  %s16 = inlined_call_operand.vmem [shape: f32[1,128], index: 16, kind: input, shape index: {}]
  %s17 = inlined_call_operand.hbm [shape: bf16[128,256], index: 17, kind: input, shape index: {}]
  %s18 = inlined_call_operand.vmem [shape: f32[1,256], index: 18, kind: input, shape index: {}]
  %s19 = inlined_call_operand.vmem [shape: f32[1,256], index: 19, kind: input, shape index: {}]
  %s20 = inlined_call_operand.vmem [shape: f32[1,256], index: 20, kind: input, shape index: {}]
  %s21 = inlined_call_operand.hbm [shape: bf16[256,128], index: 21, kind: input, shape index: {}]
  %s22 = inlined_call_operand.vmem [shape: f32[1,128], index: 22, kind: input, shape index: {}]
  %s23 = inlined_call_operand.hbm [shape: bf16[128,128], index: 23, kind: input, shape index: {}]
  %s24 = inlined_call_operand.vmem [shape: f32[1,128], index: 24, kind: input, shape index: {}]
  %s25 = inlined_call_operand.hbm [shape: f32[8,128], index: 25, kind: output, shape index: {}]
  %s26 = sld [smem:[#allocation0]]
  $region150: #{tpu_custom_call.1} parent=0
    _
  %s28 = ssub.s32 1, %s26
  %s29 = scalar_select 0, %s28, %s26
  $region1: #{tpu_custom_call.1} parent=0
    #allocation2 [shape = 'u8[32768]{0}', space=vmem, size = 0x8000, scoped, tag = 'input window, operand 0, single buffered']
    #allocation3 [shape = 's32[1]{0}', space=sflag, size = 0x4, scoped, tag = 'scoped memory for tpu_custom_call.1']
    #allocation4 [shape = 's32[1]{0}', space=sflag, size = 0x4, scoped, tag = 'scoped memory for tpu_custom_call.1']
    #allocation5 [shape = 'u8[32768]{0}', space=vmem, size = 0x8000, scoped, tag = 'input window, operand 1, single buffered']
    #allocation6 [shape = 's32[1]{0}', space=sflag, size = 0x4, scoped, tag = 'scoped memory for tpu_custom_call.1']
    #allocation7 [shape = 'u8[2048]{0}', space=vmem, size = 0x800, scoped, tag = 'input window, operand 2, single buffered']
    #allocation8 [shape = 'u8[32768]{0}', space=vmem, size = 0x8000, scoped, tag = 'input window, operand 3, single buffered']
    #allocation9 [shape = 's32[1]{0}', space=sflag, size = 0x4, scoped, tag = 'scoped memory for tpu_custom_call.1']
    #allocation10 [shape = 'u8[32768]{0}', space=vmem, size = 0x8000, scoped, tag = 'input window, operand 7, single buffered']
    #allocation11 [shape = 'u8[32768]{0}', space=vmem, size = 0x8000, scoped, tag = 'input window, operand 11, single buffered']
    #allocation12 [shape = 's32[1]{0}', space=sflag, size = 0x4, scoped, tag = 'scoped memory for tpu_custom_call.1']
    #allocation13 [shape = 'u8[32768]{0}', space=vmem, size = 0x8000, scoped, tag = 'input window, operand 15, single buffered']
    #allocation14 [shape = 'u8[65536]{0}', space=vmem, size = 0x10000, scoped, tag = 'input window, operand 17, single buffered']
    #allocation15 [shape = 's32[1]{0}', space=sflag, size = 0x4, scoped, tag = 'scoped memory for tpu_custom_call.1']
    #allocation16 [shape = 'u8[65536]{0}', space=vmem, size = 0x10000, scoped, tag = 'input window, operand 21, single buffered']
    #allocation17 [shape = 'u8[32768]{0}', space=vmem, size = 0x8000, scoped, tag = 'input window, operand 23, single buffered']
    #allocation18 [shape = 's32[1]{0}', space=sflag, size = 0x4, scoped, tag = 'scoped memory for tpu_custom_call.1']
    #allocation19 [shape = 'u8[4096]{0}', space=vmem, size = 0x1000, scoped, tag = 'output window, operand 0, single buffered']
    %30 = vsyncpa [#allocation3], 0
    %31 = vsyncpa [#allocation6], 0
    %32 = vsyncpa [#allocation9], 0
    %33 = vsyncpa [#allocation12], 0
    %34 = vsyncpa [#allocation15], 0
    %35 = vsyncpa [#allocation18], 0
    %36 = vsyncpa [#allocation4], 0
    // Predicated region
    $region2: #{tpu_custom_call.1} parent=1 // pred_check
      _
    $region3: #{tpu_custom_call.1} parent=1 // pred_check_branch
      %38 = sbr.rel (0) target = $region5
    $region4: #{tpu_custom_call.1} parent=1 // pred_region
      %s40 = ssub.s32 1024, 1024
      %41 = vsyncadd [#allocation3], %s40
      %s42 = sshll.u32 [#allocation2], 4
      %s43 = int_to_ptr.vmem [resolvable:$true] %s42
      %48 = dma.hbm_to_vmem [thread:$0]  %s0, 1024, %s43, [#allocation3], 64, 64, 4
    $region5: #{tpu_custom_call.1} parent=1 // pred_fallthru
      _
    // Predicated region
    $region6: #{tpu_custom_call.1} parent=1 // pred_check
      _
    $region7: #{tpu_custom_call.1} parent=1 // pred_check_branch
      %50 = sbr.rel (0) target = $region9
    $region8: #{tpu_custom_call.1} parent=1 // pred_region
      %s52 = ssub.s32 1024, 1024
      %53 = vsyncadd [#allocation6], %s52
      %s54 = sshll.u32 [#allocation5], 4
      %s55 = int_to_ptr.vmem [resolvable:$true] %s54
      %60 = dma.hbm_to_vmem [thread:$0]  %s1, 1024, %s55, [#allocation6], 64, 64, 4
    $region9: #{tpu_custom_call.1} parent=1 // pred_fallthru
      _
    // Predicated region
    $region10: #{tpu_custom_call.1} parent=1 // pred_check
      _
    $region11: #{tpu_custom_call.1} parent=1 // pred_check_branch
      %62 = sbr.rel (0) target = $region13
    $region12: #{tpu_custom_call.1} parent=1 // pred_region
      %s64 = ssub.s32 64, 64
      %65 = vsyncadd [#allocation6], %s64
      %s67 = sshll.u32 [#allocation7], 4
      %s68 = int_to_ptr.vmem [resolvable:$true] %s67
      %70 = dma.hbm_to_vmem [thread:$0]  %s2, 64, %s68, [#allocation6]
    $region13: #{tpu_custom_call.1} parent=1 // pred_fallthru
      _
    // Predicated region
    $region14: #{tpu_custom_call.1} parent=1 // pred_check
      _
    $region15: #{tpu_custom_call.1} parent=1 // pred_check_branch
      %72 = sbr.rel (0) target = $region17
    $region16: #{tpu_custom_call.1} parent=1 // pred_region
      %s74 = ssub.s32 1024, 1024
      %75 = vsyncadd [#allocation9], %s74
      %s76 = sshll.u32 [#allocation8], 4
      %s77 = int_to_ptr.vmem [resolvable:$true] %s76
      %82 = dma.hbm_to_vmem [thread:$0]  %s3, 1024, %s77, [#allocation9], 64, 64, 4
    $region17: #{tpu_custom_call.1} parent=1 // pred_fallthru
      _
    // Predicated region
    $region18: #{tpu_custom_call.1} parent=1 // pred_check
      _
    $region19: #{tpu_custom_call.1} parent=1 // pred_check_branch
      %84 = sbr.rel (0) target = $region21
    $region20: #{tpu_custom_call.1} parent=1 // pred_region
      _
    $region21: #{tpu_custom_call.1} parent=1 // pred_fallthru
      _
    // Predicated region
    $region22: #{tpu_custom_call.1} parent=1 // pred_check
      _
    $region23: #{tpu_custom_call.1} parent=1 // pred_check_branch
      %86 = sbr.rel (0) target = $region25
    $region24: #{tpu_custom_call.1} parent=1 // pred_region
      _
    $region25: #{tpu_custom_call.1} parent=1 // pred_fallthru
      _
    // Predicated region
    $region26: #{tpu_custom_call.1} parent=1 // pred_check
      _
    $region27: #{tpu_custom_call.1} parent=1 // pred_check_branch
      %88 = sbr.rel (0) target = $region29
    $region28: #{tpu_custom_call.1} parent=1 // pred_region
      _
    $region29: #{tpu_custom_call.1} parent=1 // pred_fallthru
      _
    // Predicated region
    $region30: #{tpu_custom_call.1} parent=1 // pred_check
      _
    $region31: #{tpu_custom_call.1} parent=1 // pred_check_branch
      %90 = sbr.rel (0) target = $region33
    $region32: #{tpu_custom_call.1} parent=1 // pred_region
      %s92 = ssub.s32 1024, 1024
      %93 = vsyncadd [#allocation9], %s92
      %s94 = sshll.u32 [#allocation10], 4
      %s95 = int_to_ptr.vmem [resolvable:$true] %s94
      %100 = dma.hbm_to_vmem [thread:$0]  %s7, 1024, %s95, [#allocation9], 64, 64, 4
    $region33: #{tpu_custom_call.1} parent=1 // pred_fallthru
      _
    // Predicated region
    $region34: #{tpu_custom_call.1} parent=1 // pred_check
      _
    $region35: #{tpu_custom_call.1} parent=1 // pred_check_branch
      %102 = sbr.rel (0) target = $region37
    $region36: #{tpu_custom_call.1} parent=1 // pred_region
      _
    $region37: #{tpu_custom_call.1} parent=1 // pred_fallthru
      _
    // Predicated region
    $region38: #{tpu_custom_call.1} parent=1 // pred_check
      _
    $region39: #{tpu_custom_call.1} parent=1 // pred_check_branch
      %104 = sbr.rel (0) target = $region41
    $region40: #{tpu_custom_call.1} parent=1 // pred_region
      _
    $region41: #{tpu_custom_call.1} parent=1 // pred_fallthru
      _
    // Predicated region
    $region42: #{tpu_custom_call.1} parent=1 // pred_check
      _
    $region43: #{tpu_custom_call.1} parent=1 // pred_check_branch
      %106 = sbr.rel (0) target = $region45
    $region44: #{tpu_custom_call.1} parent=1 // pred_region
      _
    $region45: #{tpu_custom_call.1} parent=1 // pred_fallthru
      _
    // Predicated region
    $region46: #{tpu_custom_call.1} parent=1 // pred_check
      _
    $region47: #{tpu_custom_call.1} parent=1 // pred_check_branch
      %108 = sbr.rel (0) target = $region49
    $region48: #{tpu_custom_call.1} parent=1 // pred_region
      %s110 = ssub.s32 1024, 1024
      %111 = vsyncadd [#allocation12], %s110
      %s112 = sshll.u32 [#allocation11], 4
      %s113 = int_to_ptr.vmem [resolvable:$true] %s112
      %118 = dma.hbm_to_vmem [thread:$0]  %s11, 1024, %s113, [#allocation12], 64, 64, 4
    $region49: #{tpu_custom_call.1} parent=1 // pred_fallthru
      _
    // Predicated region
    $region50: #{tpu_custom_call.1} parent=1 // pred_check
      _
    $region51: #{tpu_custom_call.1} parent=1 // pred_check_branch
      %120 = sbr.rel (0) target = $region53
    $region52: #{tpu_custom_call.1} parent=1 // pred_region
      _
    $region53: #{tpu_custom_call.1} parent=1 // pred_fallthru
      _
    // Predicated region
    $region54: #{tpu_custom_call.1} parent=1 // pred_check
      _
    $region55: #{tpu_custom_call.1} parent=1 // pred_check_branch
      %122 = sbr.rel (0) target = $region57
    $region56: #{tpu_custom_call.1} parent=1 // pred_region
      _
    $region57: #{tpu_custom_call.1} parent=1 // pred_fallthru
      _
    // Predicated region
    $region58: #{tpu_custom_call.1} parent=1 // pred_check
      _
    $region59: #{tpu_custom_call.1} parent=1 // pred_check_branch
      %124 = sbr.rel (0) target = $region61
    $region60: #{tpu_custom_call.1} parent=1 // pred_region
      _
    $region61: #{tpu_custom_call.1} parent=1 // pred_fallthru
      _
    // Predicated region
    $region62: #{tpu_custom_call.1} parent=1 // pred_check
      _
    $region63: #{tpu_custom_call.1} parent=1 // pred_check_branch
      %126 = sbr.rel (0) target = $region65
    $region64: #{tpu_custom_call.1} parent=1 // pred_region
      %s128 = ssub.s32 1024, 1024
      %129 = vsyncadd [#allocation12], %s128
      %s130 = sshll.u32 [#allocation13], 4
      %s131 = int_to_ptr.vmem [resolvable:$true] %s130
      %136 = dma.hbm_to_vmem [thread:$0]  %s15, 1024, %s131, [#allocation12], 64, 64, 4
    $region65: #{tpu_custom_call.1} parent=1 // pred_fallthru
      _
    // Predicated region
    $region66: #{tpu_custom_call.1} parent=1 // pred_check
      _
    $region67: #{tpu_custom_call.1} parent=1 // pred_check_branch
      %138 = sbr.rel (0) target = $region69
    $region68: #{tpu_custom_call.1} parent=1 // pred_region
      _
    $region69: #{tpu_custom_call.1} parent=1 // pred_fallthru
      _
    // Predicated region
    $region70: #{tpu_custom_call.1} parent=1 // pred_check
      _
    $region71: #{tpu_custom_call.1} parent=1 // pred_check_branch
      %140 = sbr.rel (0) target = $region73
    $region72: #{tpu_custom_call.1} parent=1 // pred_region
      %s142 = ssub.s32 2048, 2048
      %143 = vsyncadd [#allocation15], %s142
      %s144 = sshll.u32 [#allocation14], 4
      %s145 = int_to_ptr.vmem [resolvable:$true] %s144
      %150 = dma.hbm_to_vmem [thread:$0]  %s17, 2048, %s145, [#allocation15], 128, 128, 8
    $region73: #{tpu_custom_call.1} parent=1 // pred_fallthru
      _
    // Predicated region
    $region74: #{tpu_custom_call.1} parent=1 // pred_check
      _
    $region75: #{tpu_custom_call.1} parent=1 // pred_check_branch
      %152 = sbr.rel (0) target = $region77
    $region76: #{tpu_custom_call.1} parent=1 // pred_region
      _
    $region77: #{tpu_custom_call.1} parent=1 // pred_fallthru
      _
    // Predicated region
    $region78: #{tpu_custom_call.1} parent=1 // pred_check
      _
    $region79: #{tpu_custom_call.1} parent=1 // pred_check_branch
      %154 = sbr.rel (0) target = $region81
    $region80: #{tpu_custom_call.1} parent=1 // pred_region
      _
    $region81: #{tpu_custom_call.1} parent=1 // pred_fallthru
      _
    // Predicated region
    $region82: #{tpu_custom_call.1} parent=1 // pred_check
      _
    $region83: #{tpu_custom_call.1} parent=1 // pred_check_branch
      %156 = sbr.rel (0) target = $region85
    $region84: #{tpu_custom_call.1} parent=1 // pred_region
      _
    $region85: #{tpu_custom_call.1} parent=1 // pred_fallthru
      _
    // Predicated region
    $region86: #{tpu_custom_call.1} parent=1 // pred_check
      _
    $region87: #{tpu_custom_call.1} parent=1 // pred_check_branch
      %158 = sbr.rel (0) target = $region89
    $region88: #{tpu_custom_call.1} parent=1 // pred_region
      %s160 = ssub.s32 2048, 2048
      %161 = vsyncadd [#allocation15], %s160
      %s162 = sshll.u32 [#allocation16], 4
      %s163 = int_to_ptr.vmem [resolvable:$true] %s162
      %168 = dma.hbm_to_vmem [thread:$0]  %s21, 2048, %s163, [#allocation15], 64, 64, 4
    $region89: #{tpu_custom_call.1} parent=1 // pred_fallthru
      _
    // Predicated region
    $region90: #{tpu_custom_call.1} parent=1 // pred_check
      _
    $region91: #{tpu_custom_call.1} parent=1 // pred_check_branch
      %170 = sbr.rel (0) target = $region93
    $region92: #{tpu_custom_call.1} parent=1 // pred_region
      _
    $region93: #{tpu_custom_call.1} parent=1 // pred_fallthru
      _
    // Predicated region
    $region94: #{tpu_custom_call.1} parent=1 // pred_check
      _
    $region95: #{tpu_custom_call.1} parent=1 // pred_check_branch
      %172 = sbr.rel (0) target = $region97
    $region96: #{tpu_custom_call.1} parent=1 // pred_region
      %s174 = ssub.s32 1024, 1024
      %175 = vsyncadd [#allocation18], %s174
      %s176 = sshll.u32 [#allocation17], 4
      %s177 = int_to_ptr.vmem [resolvable:$true] %s176
      %182 = dma.hbm_to_vmem [thread:$0]  %s23, 1024, %s177, [#allocation18], 64, 64, 4
    $region97: #{tpu_custom_call.1} parent=1 // pred_fallthru
      _
    // Predicated region
    $region98: #{tpu_custom_call.1} parent=1 // pred_check
      _
    $region99: #{tpu_custom_call.1} parent=1 // pred_check_branch
      %184 = sbr.rel (0) target = $region101
    $region100: #{tpu_custom_call.1} parent=1 // pred_region
      _
    $region101: #{tpu_custom_call.1} parent=1 // pred_fallthru
      _
    // Predicated region
    $region102: #{tpu_custom_call.1} parent=1 // pred_check
      _
    $region103: #{tpu_custom_call.1} parent=1 // pred_check_branch
      %186 = sbr.rel (0) target = $region105
    $region104: #{tpu_custom_call.1} parent=1 // pred_region
      %187 = dma.done [#allocation3], 1024
    $region105: #{tpu_custom_call.1} parent=1 // pred_fallthru
      _
    // Predicated region
    $region106: #{tpu_custom_call.1} parent=1 // pred_check
      _
    $region107: #{tpu_custom_call.1} parent=1 // pred_check_branch
      %189 = sbr.rel (0) target = $region109
    $region108: #{tpu_custom_call.1} parent=1 // pred_region
      %190 = dma.done [#allocation6], 1024
    $region109: #{tpu_custom_call.1} parent=1 // pred_fallthru
      _
    // Predicated region
    $region110: #{tpu_custom_call.1} parent=1 // pred_check
      _
    $region111: #{tpu_custom_call.1} parent=1 // pred_check_branch
      %192 = sbr.rel (0) target = $region113
    $region112: #{tpu_custom_call.1} parent=1 // pred_region
      %193 = dma.done [#allocation6], 64
    $region113: #{tpu_custom_call.1} parent=1 // pred_fallthru
      _
    // Predicated region
    $region114: #{tpu_custom_call.1} parent=1 // pred_check
      _
    $region115: #{tpu_custom_call.1} parent=1 // pred_check_branch
      %195 = sbr.rel (0) target = $region117
    $region116: #{tpu_custom_call.1} parent=1 // pred_region
      %196 = dma.done [#allocation9], 1024
    $region117: #{tpu_custom_call.1} parent=1 // pred_fallthru
      _
    // Predicated region
    $region118: #{tpu_custom_call.1} parent=1 // pred_check
      _
    $region119: #{tpu_custom_call.1} parent=1 // pred_check_branch
      %198 = sbr.rel (0) target = $region121
    $region120: #{tpu_custom_call.1} parent=1 // pred_region
      %199 = dma.done [#allocation9], 1024
    $region121: #{tpu_custom_call.1} parent=1 // pred_fallthru
      _
    // Predicated region
    $region122: #{tpu_custom_call.1} parent=1 // pred_check
      _
    $region123: #{tpu_custom_call.1} parent=1 // pred_check_branch
      %201 = sbr.rel (0) target = $region125
    $region124: #{tpu_custom_call.1} parent=1 // pred_region
      %202 = dma.done [#allocation12], 1024
    $region125: #{tpu_custom_call.1} parent=1 // pred_fallthru
      _
    // Predicated region
    $region126: #{tpu_custom_call.1} parent=1 // pred_check
      _
    $region127: #{tpu_custom_call.1} parent=1 // pred_check_branch
      %204 = sbr.rel (0) target = $region129
    $region128: #{tpu_custom_call.1} parent=1 // pred_region
      %205 = dma.done [#allocation12], 1024
    $region129: #{tpu_custom_call.1} parent=1 // pred_fallthru
      _
    // Predicated region
    $region130: #{tpu_custom_call.1} parent=1 // pred_check
      _
    $region131: #{tpu_custom_call.1} parent=1 // pred_check_branch
      %207 = sbr.rel (0) target = $region133
    $region132: #{tpu_custom_call.1} parent=1 // pred_region
      %208 = dma.done [#allocation15], 2048
    $region133: #{tpu_custom_call.1} parent=1 // pred_fallthru
      _
    // Predicated region
    $region134: #{tpu_custom_call.1} parent=1 // pred_check
      _
    $region135: #{tpu_custom_call.1} parent=1 // pred_check_branch
      %210 = sbr.rel (0) target = $region137
    $region136: #{tpu_custom_call.1} parent=1 // pred_region
      %211 = dma.done [#allocation15], 2048
    $region137: #{tpu_custom_call.1} parent=1 // pred_fallthru
      _
    // Predicated region
    $region138: #{tpu_custom_call.1} parent=1 // pred_check
      _
    $region139: #{tpu_custom_call.1} parent=1 // pred_check_branch
      %213 = sbr.rel (0) target = $region141
    $region140: #{tpu_custom_call.1} parent=1 // pred_region
      %214 = dma.done [#allocation18], 1024
    $region141: #{tpu_custom_call.1} parent=1 // pred_fallthru
      _
    %v216 = vld [vmem:[#allocation2] sm:$0xf]
    %v217 = vld [vmem:[#allocation2 + $0x4] sm:$0xf]
    %v218 = vld [vmem:[#allocation2 + $0x8] sm:$0xf]
    %v219 = vld [vmem:[#allocation2 + $0xc] sm:$0xf]
    %v220 = vld [vmem:[#allocation2 + $0x10] sm:$0xf]
    %v221 = vld [vmem:[#allocation2 + $0x14] sm:$0xf]
    %v222 = vld [vmem:[#allocation2 + $0x18] sm:$0xf]
    %v223 = vld [vmem:[#allocation2 + $0x1c] sm:$0xf]
    %v224 = vld [vmem:[#allocation2 + $0x20] sm:$0xf]
    %v225 = vld [vmem:[#allocation2 + $0x24] sm:$0xf]
    %v226 = vld [vmem:[#allocation2 + $0x28] sm:$0xf]
    %v227 = vld [vmem:[#allocation2 + $0x2c] sm:$0xf]
    %v228 = vld [vmem:[#allocation2 + $0x30] sm:$0xf]
    %v229 = vld [vmem:[#allocation2 + $0x34] sm:$0xf]
    %v230 = vld [vmem:[#allocation2 + $0x38] sm:$0xf]
    %v231 = vld [vmem:[#allocation2 + $0x3c] sm:$0xf]
    %v232 = vld [vmem:[#allocation5] sm:$0xf]
    %v233 = vld [vmem:[#allocation5 + $0x4] sm:$0xf]
    %v234 = vld [vmem:[#allocation5 + $0x8] sm:$0xf]
    %v235 = vld [vmem:[#allocation5 + $0xc] sm:$0xf]
    %v236 = vld [vmem:[#allocation5 + $0x10] sm:$0xf]
    %v237 = vld [vmem:[#allocation5 + $0x14] sm:$0xf]
    %v238 = vld [vmem:[#allocation5 + $0x18] sm:$0xf]
    %v239 = vld [vmem:[#allocation5 + $0x1c] sm:$0xf]
    %v240 = vld [vmem:[#allocation5 + $0x20] sm:$0xf]
    %v241 = vld [vmem:[#allocation5 + $0x24] sm:$0xf]
    %v242 = vld [vmem:[#allocation5 + $0x28] sm:$0xf]
    %v243 = vld [vmem:[#allocation5 + $0x2c] sm:$0xf]
    %v244 = vld [vmem:[#allocation5 + $0x30] sm:$0xf]
    %v245 = vld [vmem:[#allocation5 + $0x34] sm:$0xf]
    %v246 = vld [vmem:[#allocation5 + $0x38] sm:$0xf]
    %v247 = vld [vmem:[#allocation5 + $0x3c] sm:$0xf]
    %v264 = vunpack.c.l.b16 %v216
    %v265 = vunpack.c.l.b16 %v217
    %v266 = vunpack.c.l.b16 %v218
    %v267 = vunpack.c.l.b16 %v219
    %v268 = vunpack.c.l.b16 %v220
    %v269 = vunpack.c.l.b16 %v221
    %v270 = vunpack.c.l.b16 %v222
    %v271 = vunpack.c.l.b16 %v223
    %v272 = vunpack.c.l.b16 %v224
    %v273 = vunpack.c.l.b16 %v225
    %v274 = vunpack.c.l.b16 %v226
    %v275 = vunpack.c.l.b16 %v227
    %v276 = vunpack.c.l.b16 %v228
    %v277 = vunpack.c.l.b16 %v229
    %v278 = vunpack.c.l.b16 %v230
    %v279 = vunpack.c.l.b16 %v231
    %v280 = vpack.c.b16 %v265, %v264
    %v281 = vpack.c.b16 %v267, %v266
    %v282 = vpack.c.b16 %v269, %v268
    %v283 = vpack.c.b16 %v271, %v270
    %v284 = vpack.c.b16 %v273, %v272
    %v285 = vpack.c.b16 %v275, %v274
    %v286 = vpack.c.b16 %v277, %v276
    %v287 = vpack.c.b16 %v279, %v278
    %v312 = vunpack.c.l.b16 %v232
    %v313 = vunpack.c.l.b16 %v233
    %v314 = vunpack.c.l.b16 %v234
    %v315 = vunpack.c.l.b16 %v235
    %v316 = vunpack.c.l.b16 %v236
    %v317 = vunpack.c.l.b16 %v237
    %v318 = vunpack.c.l.b16 %v238
    %v319 = vunpack.c.l.b16 %v239
    %v320 = vunpack.c.l.b16 %v240
    %v321 = vunpack.c.l.b16 %v241
    %v322 = vunpack.c.l.b16 %v242
    %v323 = vunpack.c.l.b16 %v243
    %v324 = vunpack.c.l.b16 %v244
    %v325 = vunpack.c.l.b16 %v245
    %v326 = vunpack.c.l.b16 %v246
    %v327 = vunpack.c.l.b16 %v247
    %v328 = vpack.c.b16 %v313, %v312
    %v329 = vpack.c.b16 %v315, %v314
    %v330 = vpack.c.b16 %v317, %v316
    %v331 = vpack.c.b16 %v319, %v318
    %v332 = vpack.c.b16 %v321, %v320
    %v333 = vpack.c.b16 %v323, %v322
    %v334 = vpack.c.b16 %v325, %v324
    %v335 = vpack.c.b16 %v327, %v326
    %344 = vmatprep.subr.bf16.mxu0 0
    %345 = vmatpush1.bf16.msra.mxu0 %v335
    %346 = vmatprep.subr.bf16.mxu0 0
    %347 = vmatpush1.bf16.msra.mxu0 %v334
    %348 = vmatprep.subr.bf16.mxu0 0
    %349 = vmatpush1.bf16.msra.mxu0 %v333
    %350 = vmatprep.subr.bf16.mxu0 0
    %351 = vmatpush1.bf16.msra.mxu0 %v332
    %352 = vmatprep.subr.bf16.mxu0 0
    %353 = vmatpush1.bf16.msra.mxu0 %v331
    %354 = vmatprep.subr.bf16.mxu0 0
    %355 = vmatpush1.bf16.msra.mxu0 %v330
    %356 = vmatprep.subr.bf16.mxu0 0
    %357 = vmatpush1.bf16.msra.mxu0 %v329
    %358 = vmatprep.subr.bf16.mxu0 0
    %359 = vmatpush1.bf16.msra.mxu0 %v328
    %360 = vmatprep.subr.bf16.mxu0 0
    %361 = vmatpush2.bf16.msra.mxu0 0
    %362 = vmatprep.subr.bf16.mxu0 0
    %363 = vmatpush2.bf16.msra.mxu0 0
    %364 = vmatprep.subr.bf16.mxu0 0
    %365 = vmatpush2.bf16.msra.mxu0 0
    %366 = vmatprep.subr.bf16.mxu0 0
    %367 = vmatpush2.bf16.msra.mxu0 0
    %368 = vmatprep.subr.bf16.mxu0 0
    %369 = vmatpush2.bf16.msra.mxu0 0
    %370 = vmatprep.subr.bf16.mxu0 0
    %371 = vmatpush2.bf16.msra.mxu0 0
    %372 = vmatprep.subr.bf16.mxu0 0
    %373 = vmatpush2.bf16.msra.mxu0 0
    %374 = vmatprep.subr.bf16.mxu0 0
    %375 = vmatpush2.bf16.msra.mxu0 0
    %376 = vmatprep.mubr.bf16.mxu0 0
    %377 = vmatmul.mubr.bf16.gmra.mxu0 %v280
    %v378 = vpop.f32.mrf.mxu0
    %v379 = vadd.f32 0.0, %v378
    %v380 = vpop.f32.mrf.mxu0
    %v381 = vpop.f32.mrf.mxu0
    %v382 = vadd.f32 0.0, %v381
    %v383 = vpop.f32.mrf.mxu0
    %384 = vmatprep.mubr.bf16.mxu0 0
    %385 = vmatmul.mubr.bf16.gmra.mxu0 %v281
    %v386 = vpop.f32.mrf.mxu0
    %v387 = vadd.f32 0.0, %v386
    %v388 = vpop.f32.mrf.mxu0
    %v389 = vpop.f32.mrf.mxu0
    %v390 = vadd.f32 0.0, %v389
    %v391 = vpop.f32.mrf.mxu0
    %392 = vmatprep.mubr.bf16.mxu0 0
    %393 = vmatmul.mubr.bf16.gmra.mxu0 %v282
    %v394 = vpop.f32.mrf.mxu0
    %v395 = vadd.f32 0.0, %v394
    %v396 = vpop.f32.mrf.mxu0
    %v397 = vpop.f32.mrf.mxu0
    %v398 = vadd.f32 0.0, %v397
    %v399 = vpop.f32.mrf.mxu0
    %400 = vmatprep.mubr.bf16.mxu0 0
    %401 = vmatmul.mubr.bf16.gmra.mxu0 %v283
    %v402 = vpop.f32.mrf.mxu0
    %v403 = vadd.f32 0.0, %v402
    %v404 = vpop.f32.mrf.mxu0
    %v405 = vpop.f32.mrf.mxu0
    %v406 = vadd.f32 0.0, %v405
    %v407 = vpop.f32.mrf.mxu0
    %408 = vmatprep.mubr.bf16.mxu0 0
    %409 = vmatmul.mubr.bf16.gmra.mxu0 %v284
    %v410 = vpop.f32.mrf.mxu0
    %v411 = vadd.f32 0.0, %v410
    %v412 = vpop.f32.mrf.mxu0
    %v413 = vpop.f32.mrf.mxu0
    %v414 = vadd.f32 0.0, %v413
    %v415 = vpop.f32.mrf.mxu0
    %416 = vmatprep.mubr.bf16.mxu0 0
    %417 = vmatmul.mubr.bf16.gmra.mxu0 %v285
    %v418 = vpop.f32.mrf.mxu0
    %v419 = vadd.f32 0.0, %v418
    %v420 = vpop.f32.mrf.mxu0
    %v421 = vpop.f32.mrf.mxu0
    %v422 = vadd.f32 0.0, %v421
    %v423 = vpop.f32.mrf.mxu0
    %424 = vmatprep.mubr.bf16.mxu0 0
    %425 = vmatmul.mubr.bf16.gmra.mxu0 %v286
    %v426 = vpop.f32.mrf.mxu0
    %v427 = vadd.f32 0.0, %v426
    %v428 = vpop.f32.mrf.mxu0
    %v429 = vpop.f32.mrf.mxu0
    %v430 = vadd.f32 0.0, %v429
    %v431 = vpop.f32.mrf.mxu0
    %432 = vmatprep.mubr.bf16.mxu0 0
    %433 = vmatmul.mubr.bf16.gmra.mxu0 %v287
    %v434 = vpop.f32.mrf.mxu0
    %v435 = vadd.f32 0.0, %v434
    %v436 = vpop.f32.mrf.mxu0
    %v437 = vpop.f32.mrf.mxu0
    %v438 = vadd.f32 0.0, %v437
    %v439 = vpop.f32.mrf.mxu0
    %440 = vdwg.mxu0
    %v441 = vpack.c.bf16 %v382, %v379
    %v442 = vpack.c.bf16 %v390, %v387
    %v443 = vpack.c.bf16 %v398, %v395
    %v444 = vpack.c.bf16 %v406, %v403
    %v445 = vpack.c.bf16 %v414, %v411
    %v446 = vpack.c.bf16 %v422, %v419
    %v447 = vpack.c.bf16 %v430, %v427
    %v448 = vpack.c.bf16 %v438, %v435
    %v449 = vld [vmem:[#allocation8] sm:$0xf]
    %v450 = vld [vmem:[#allocation8 + $0x4] sm:$0xf]
    %v451 = vld [vmem:[#allocation8 + $0x8] sm:$0xf]
    %v452 = vld [vmem:[#allocation8 + $0xc] sm:$0xf]
    %v453 = vld [vmem:[#allocation8 + $0x10] sm:$0xf]
    %v454 = vld [vmem:[#allocation8 + $0x14] sm:$0xf]
    %v455 = vld [vmem:[#allocation8 + $0x18] sm:$0xf]
    %v456 = vld [vmem:[#allocation8 + $0x1c] sm:$0xf]
    %v457 = vld [vmem:[#allocation8 + $0x20] sm:$0xf]
    %v458 = vld [vmem:[#allocation8 + $0x24] sm:$0xf]
    %v459 = vld [vmem:[#allocation8 + $0x28] sm:$0xf]
    %v460 = vld [vmem:[#allocation8 + $0x2c] sm:$0xf]
    %v461 = vld [vmem:[#allocation8 + $0x30] sm:$0xf]
    %v462 = vld [vmem:[#allocation8 + $0x34] sm:$0xf]
    %v463 = vld [vmem:[#allocation8 + $0x38] sm:$0xf]
    %v464 = vld [vmem:[#allocation8 + $0x3c] sm:$0xf]
    %v465 = vld [vmem:[%s4] sm:$0x1]
    %v467 = vlaneseq
    %v468 = vshrl.u32 %v467, 7
    %v469 = vsub.s32 0, %v468
    %v470 = vrot.slane %v465, %v469
    %v488 = vunpack.c.l.b16 %v449
    %v489 = vunpack.c.l.b16 %v450
    %v490 = vunpack.c.l.b16 %v451
    %v491 = vunpack.c.l.b16 %v452
    %v492 = vunpack.c.l.b16 %v453
    %v493 = vunpack.c.l.b16 %v454
    %v494 = vunpack.c.l.b16 %v455
    %v495 = vunpack.c.l.b16 %v456
    %v496 = vunpack.c.l.b16 %v457
    %v497 = vunpack.c.l.b16 %v458
    %v498 = vunpack.c.l.b16 %v459
    %v499 = vunpack.c.l.b16 %v460
    %v500 = vunpack.c.l.b16 %v461
    %v501 = vunpack.c.l.b16 %v462
    %v502 = vunpack.c.l.b16 %v463
    %v503 = vunpack.c.l.b16 %v464
    %v504 = vpack.c.b16 %v489, %v488
    %v505 = vpack.c.b16 %v491, %v490
    %v506 = vpack.c.b16 %v493, %v492
    %v507 = vpack.c.b16 %v495, %v494
    %v508 = vpack.c.b16 %v497, %v496
    %v509 = vpack.c.b16 %v499, %v498
    %v510 = vpack.c.b16 %v501, %v500
    %v511 = vpack.c.b16 %v503, %v502
    %520 = vmatprep.subr.bf16.mxu0 0
    %521 = vmatpush1.bf16.msra.mxu0 %v511
    %522 = vmatprep.subr.bf16.mxu0 0
    %523 = vmatpush1.bf16.msra.mxu0 %v510
    %524 = vmatprep.subr.bf16.mxu0 0
    %525 = vmatpush1.bf16.msra.mxu0 %v509
    %526 = vmatprep.subr.bf16.mxu0 0
    %527 = vmatpush1.bf16.msra.mxu0 %v508
    %528 = vmatprep.subr.bf16.mxu0 0
    %529 = vmatpush1.bf16.msra.mxu0 %v507
    %530 = vmatprep.subr.bf16.mxu0 0
    %531 = vmatpush1.bf16.msra.mxu0 %v506
    %532 = vmatprep.subr.bf16.mxu0 0
    %533 = vmatpush1.bf16.msra.mxu0 %v505
    %534 = vmatprep.subr.bf16.mxu0 0
    %535 = vmatpush1.bf16.msra.mxu0 %v504
    %536 = vmatprep.subr.bf16.mxu0 0
    %537 = vmatpush2.bf16.msra.mxu0 0
    %538 = vmatprep.subr.bf16.mxu0 0
    %539 = vmatpush2.bf16.msra.mxu0 0
    %540 = vmatprep.subr.bf16.mxu0 0
    %541 = vmatpush2.bf16.msra.mxu0 0
    %542 = vmatprep.subr.bf16.mxu0 0
    %543 = vmatpush2.bf16.msra.mxu0 0
    %544 = vmatprep.subr.bf16.mxu0 0
    %545 = vmatpush2.bf16.msra.mxu0 0
    %546 = vmatprep.subr.bf16.mxu0 0
    %547 = vmatpush2.bf16.msra.mxu0 0
    %548 = vmatprep.subr.bf16.mxu0 0
    %549 = vmatpush2.bf16.msra.mxu0 0
    %550 = vmatprep.subr.bf16.mxu0 0
    %551 = vmatpush2.bf16.msra.mxu0 0
    %552 = vmatprep.mubr.bf16.mxu0 0
    %553 = vmatmul.mubr.bf16.gmra.mxu0 %v441
    %v554 = vpop.f32.mrf.mxu0
    %v555 = vadd.f32 %v470, %v554
    %v556 = vpop.f32.mrf.mxu0
    %v557 = vpop.f32.mrf.mxu0
    %v558 = vadd.f32 %v470, %v557
    %v559 = vpop.f32.mrf.mxu0
    %560 = vmatprep.mubr.bf16.mxu0 0
    %561 = vmatmul.mubr.bf16.gmra.mxu0 %v442
    %v562 = vpop.f32.mrf.mxu0
    %v563 = vadd.f32 %v470, %v562
    %v564 = vpop.f32.mrf.mxu0
    %v565 = vpop.f32.mrf.mxu0
    %v566 = vadd.f32 %v470, %v565
    %v567 = vpop.f32.mrf.mxu0
    %568 = vmatprep.mubr.bf16.mxu0 0
    %569 = vmatmul.mubr.bf16.gmra.mxu0 %v443
    %v570 = vpop.f32.mrf.mxu0
    %v571 = vadd.f32 %v470, %v570
    %v572 = vpop.f32.mrf.mxu0
    %v573 = vpop.f32.mrf.mxu0
    %v574 = vadd.f32 %v470, %v573
    %v575 = vpop.f32.mrf.mxu0
    %576 = vmatprep.mubr.bf16.mxu0 0
    %577 = vmatmul.mubr.bf16.gmra.mxu0 %v444
    %v578 = vpop.f32.mrf.mxu0
    %v579 = vadd.f32 %v470, %v578
    %v580 = vpop.f32.mrf.mxu0
    %v581 = vpop.f32.mrf.mxu0
    %v582 = vadd.f32 %v470, %v581
    %v583 = vpop.f32.mrf.mxu0
    %584 = vmatprep.mubr.bf16.mxu0 0
    %585 = vmatmul.mubr.bf16.gmra.mxu0 %v445
    %v586 = vpop.f32.mrf.mxu0
    %v587 = vadd.f32 %v470, %v586
    %v588 = vpop.f32.mrf.mxu0
    %v589 = vpop.f32.mrf.mxu0
    %v590 = vadd.f32 %v470, %v589
    %v591 = vpop.f32.mrf.mxu0
    %592 = vmatprep.mubr.bf16.mxu0 0
    %593 = vmatmul.mubr.bf16.gmra.mxu0 %v446
    %v594 = vpop.f32.mrf.mxu0
    %v595 = vadd.f32 %v470, %v594
    %v596 = vpop.f32.mrf.mxu0
    %v597 = vpop.f32.mrf.mxu0
    %v598 = vadd.f32 %v470, %v597
    %v599 = vpop.f32.mrf.mxu0
    %600 = vmatprep.mubr.bf16.mxu0 0
    %601 = vmatmul.mubr.bf16.gmra.mxu0 %v447
    %v602 = vpop.f32.mrf.mxu0
    %v603 = vadd.f32 %v470, %v602
    %v604 = vpop.f32.mrf.mxu0
    %v605 = vpop.f32.mrf.mxu0
    %v606 = vadd.f32 %v470, %v605
    %v607 = vpop.f32.mrf.mxu0
    %608 = vmatprep.mubr.bf16.mxu0 0
    %609 = vmatmul.mubr.bf16.gmra.mxu0 %v448
    %v610 = vpop.f32.mrf.mxu0
    %v611 = vadd.f32 %v470, %v610
    %v612 = vpop.f32.mrf.mxu0
    %v613 = vpop.f32.mrf.mxu0
    %v614 = vadd.f32 %v470, %v613
    %v615 = vpop.f32.mrf.mxu0
    %616 = vdwg.mxu0
    %v617 = vmax.f32 %v555, 0.0
    %v618 = vmax.f32 %v558, 0.0
    %v619 = vmax.f32 %v563, 0.0
    %v620 = vmax.f32 %v566, 0.0
    %v621 = vmax.f32 %v571, 0.0
    %v622 = vmax.f32 %v574, 0.0
    %v623 = vmax.f32 %v579, 0.0
    %v624 = vmax.f32 %v582, 0.0
    %v625 = vmax.f32 %v587, 0.0
    %v626 = vmax.f32 %v590, 0.0
    %v627 = vmax.f32 %v595, 0.0
    %v628 = vmax.f32 %v598, 0.0
    %v629 = vmax.f32 %v603, 0.0
    %v630 = vmax.f32 %v606, 0.0
    %v631 = vmax.f32 %v611, 0.0
    %v632 = vmax.f32 %v614, 0.0
    %v633 = vld [vmem:[%s5] sm:$0x1]
    %v635 = vlaneseq
    %v636 = vshrl.u32 %v635, 7
    %v637 = vsub.s32 0, %v636
    %v638 = vrot.slane %v633, %v637
    %v640 = vmul.f32 %v617, %v638
    %v641 = vmul.f32 %v618, %v638
    %v642 = vmul.f32 %v619, %v638
    %v643 = vmul.f32 %v620, %v638
    %v644 = vmul.f32 %v621, %v638
    %v645 = vmul.f32 %v622, %v638
    %v646 = vmul.f32 %v623, %v638
    %v647 = vmul.f32 %v624, %v638
    %v648 = vmul.f32 %v625, %v638
    %v649 = vmul.f32 %v626, %v638
    %v650 = vmul.f32 %v627, %v638
    %v651 = vmul.f32 %v628, %v638
    %v652 = vmul.f32 %v629, %v638
    %v653 = vmul.f32 %v630, %v638
    %v654 = vmul.f32 %v631, %v638
    %v655 = vmul.f32 %v632, %v638
    %v656 = vld [vmem:[%s6] sm:$0x1]
    %v658 = vlaneseq
    %v659 = vshrl.u32 %v658, 7
    %v660 = vsub.s32 0, %v659
    %v661 = vrot.slane %v656, %v660
    %v663 = vadd.f32 %v640, %v661
    %v664 = vadd.f32 %v641, %v661
    %v665 = vadd.f32 %v642, %v661
    %v666 = vadd.f32 %v643, %v661
    %v667 = vadd.f32 %v644, %v661
    %v668 = vadd.f32 %v645, %v661
    %v669 = vadd.f32 %v646, %v661
    %v670 = vadd.f32 %v647, %v661
    %v671 = vadd.f32 %v648, %v661
    %v672 = vadd.f32 %v649, %v661
    %v673 = vadd.f32 %v650, %v661
    %v674 = vadd.f32 %v651, %v661
    %v675 = vadd.f32 %v652, %v661
    %v676 = vadd.f32 %v653, %v661
    %v677 = vadd.f32 %v654, %v661
    %v678 = vadd.f32 %v655, %v661
    %v679 = vpack.c.bf16 %v664, %v663
    %v680 = vpack.c.bf16 %v666, %v665
    %v681 = vpack.c.bf16 %v668, %v667
    %v682 = vpack.c.bf16 %v670, %v669
    %v683 = vpack.c.bf16 %v672, %v671
    %v684 = vpack.c.bf16 %v674, %v673
    %v685 = vpack.c.bf16 %v676, %v675
    %v686 = vpack.c.bf16 %v678, %v677
    %687 = vmatprep.subr.bf16.mxu0 0
    %688 = vmatpush1.bf16.msra.mxu0 %v686
    %689 = vmatprep.subr.bf16.mxu0 0
    %690 = vmatpush1.bf16.msra.mxu0 %v685
    %691 = vmatprep.subr.bf16.mxu0 0
    %692 = vmatpush1.bf16.msra.mxu0 %v684
    %693 = vmatprep.subr.bf16.mxu0 0
    %694 = vmatpush1.bf16.msra.mxu0 %v683
    %695 = vmatprep.subr.bf16.mxu0 0
    %696 = vmatpush1.bf16.msra.mxu0 %v682
    %697 = vmatprep.subr.bf16.mxu0 0
    %698 = vmatpush1.bf16.msra.mxu0 %v681
    %699 = vmatprep.subr.bf16.mxu0 0
    %700 = vmatpush1.bf16.msra.mxu0 %v680
    %701 = vmatprep.subr.bf16.mxu0 0
    %702 = vmatpush1.bf16.msra.mxu0 %v679
    %703 = vmatprep.subr.bf16.mxu0 0
    %704 = vmatpush2.bf16.msra.mxu0 0
    %705 = vmatprep.subr.bf16.mxu0 0
    %706 = vmatpush2.bf16.msra.mxu0 0
    %707 = vmatprep.subr.bf16.mxu0 0
    %708 = vmatpush2.bf16.msra.mxu0 0
    %709 = vmatprep.subr.bf16.mxu0 0
    %710 = vmatpush2.bf16.msra.mxu0 0
    %711 = vmatprep.subr.bf16.mxu0 0
    %712 = vmatpush2.bf16.msra.mxu0 0
    %713 = vmatprep.subr.bf16.mxu0 0
    %714 = vmatpush2.bf16.msra.mxu0 0
    %715 = vmatprep.subr.bf16.mxu0 0
    %716 = vmatpush2.bf16.msra.mxu0 0
    %717 = vmatprep.subr.bf16.mxu0 0
    %718 = vmatpush2.bf16.msra.mxu0 0
    %719 = vmatprep.mubr.bf16.mxu0 0
    %720 = vmatmul.mubr.bf16.gmra.mxu0 %v280
    %v721 = vpop.f32.mrf.mxu0
    %v722 = vadd.f32 0.0, %v721
    %v723 = vpop.f32.mrf.mxu0
    %v724 = vpop.f32.mrf.mxu0
    %v725 = vadd.f32 0.0, %v724
    %v726 = vpop.f32.mrf.mxu0
    %727 = vmatprep.mubr.bf16.mxu0 0
    %728 = vmatmul.mubr.bf16.gmra.mxu0 %v281
    %v729 = vpop.f32.mrf.mxu0
    %v730 = vadd.f32 0.0, %v729
    %v731 = vpop.f32.mrf.mxu0
    %v732 = vpop.f32.mrf.mxu0
    %v733 = vadd.f32 0.0, %v732
    %v734 = vpop.f32.mrf.mxu0
    %735 = vmatprep.mubr.bf16.mxu0 0
    %736 = vmatmul.mubr.bf16.gmra.mxu0 %v282
    %v737 = vpop.f32.mrf.mxu0
    %v738 = vadd.f32 0.0, %v737
    %v739 = vpop.f32.mrf.mxu0
    %v740 = vpop.f32.mrf.mxu0
    %v741 = vadd.f32 0.0, %v740
    %v742 = vpop.f32.mrf.mxu0
    %743 = vmatprep.mubr.bf16.mxu0 0
    %744 = vmatmul.mubr.bf16.gmra.mxu0 %v283
    %v745 = vpop.f32.mrf.mxu0
    %v746 = vadd.f32 0.0, %v745
    %v747 = vpop.f32.mrf.mxu0
    %v748 = vpop.f32.mrf.mxu0
    %v749 = vadd.f32 0.0, %v748
    %v750 = vpop.f32.mrf.mxu0
    %751 = vmatprep.mubr.bf16.mxu0 0
    %752 = vmatmul.mubr.bf16.gmra.mxu0 %v284
    %v753 = vpop.f32.mrf.mxu0
    %v754 = vadd.f32 0.0, %v753
    %v755 = vpop.f32.mrf.mxu0
    %v756 = vpop.f32.mrf.mxu0
    %v757 = vadd.f32 0.0, %v756
    %v758 = vpop.f32.mrf.mxu0
    %759 = vmatprep.mubr.bf16.mxu0 0
    %760 = vmatmul.mubr.bf16.gmra.mxu0 %v285
    %v761 = vpop.f32.mrf.mxu0
    %v762 = vadd.f32 0.0, %v761
    %v763 = vpop.f32.mrf.mxu0
    %v764 = vpop.f32.mrf.mxu0
    %v765 = vadd.f32 0.0, %v764
    %v766 = vpop.f32.mrf.mxu0
    %767 = vmatprep.mubr.bf16.mxu0 0
    %768 = vmatmul.mubr.bf16.gmra.mxu0 %v286
    %v769 = vpop.f32.mrf.mxu0
    %v770 = vadd.f32 0.0, %v769
    %v771 = vpop.f32.mrf.mxu0
    %v772 = vpop.f32.mrf.mxu0
    %v773 = vadd.f32 0.0, %v772
    %v774 = vpop.f32.mrf.mxu0
    %775 = vmatprep.mubr.bf16.mxu0 0
    %776 = vmatmul.mubr.bf16.gmra.mxu0 %v287
    %v777 = vpop.f32.mrf.mxu0
    %v778 = vadd.f32 0.0, %v777
    %v779 = vpop.f32.mrf.mxu0
    %v780 = vpop.f32.mrf.mxu0
    %v781 = vadd.f32 0.0, %v780
    %v782 = vpop.f32.mrf.mxu0
    %783 = vdwg.mxu0
    %v784 = vpack.c.bf16 %v725, %v722
    %v785 = vpack.c.bf16 %v733, %v730
    %v786 = vpack.c.bf16 %v741, %v738
    %v787 = vpack.c.bf16 %v749, %v746
    %v788 = vpack.c.bf16 %v757, %v754
    %v789 = vpack.c.bf16 %v765, %v762
    %v790 = vpack.c.bf16 %v773, %v770
    %v791 = vpack.c.bf16 %v781, %v778
    %v792 = vld [vmem:[#allocation10] sm:$0xf]
    %v793 = vld [vmem:[#allocation10 + $0x4] sm:$0xf]
    %v794 = vld [vmem:[#allocation10 + $0x8] sm:$0xf]
    %v795 = vld [vmem:[#allocation10 + $0xc] sm:$0xf]
    %v796 = vld [vmem:[#allocation10 + $0x10] sm:$0xf]
    %v797 = vld [vmem:[#allocation10 + $0x14] sm:$0xf]
    %v798 = vld [vmem:[#allocation10 + $0x18] sm:$0xf]
    %v799 = vld [vmem:[#allocation10 + $0x1c] sm:$0xf]
    %v800 = vld [vmem:[#allocation10 + $0x20] sm:$0xf]
    %v801 = vld [vmem:[#allocation10 + $0x24] sm:$0xf]
    %v802 = vld [vmem:[#allocation10 + $0x28] sm:$0xf]
    %v803 = vld [vmem:[#allocation10 + $0x2c] sm:$0xf]
    %v804 = vld [vmem:[#allocation10 + $0x30] sm:$0xf]
    %v805 = vld [vmem:[#allocation10 + $0x34] sm:$0xf]
    %v806 = vld [vmem:[#allocation10 + $0x38] sm:$0xf]
    %v807 = vld [vmem:[#allocation10 + $0x3c] sm:$0xf]
    %v808 = vld [vmem:[%s8] sm:$0x1]
    %v810 = vlaneseq
    %v811 = vshrl.u32 %v810, 7
    %v812 = vsub.s32 0, %v811
    %v813 = vrot.slane %v808, %v812
    %v831 = vunpack.c.l.b16 %v792
    %v832 = vunpack.c.l.b16 %v793
    %v833 = vunpack.c.l.b16 %v794
    %v834 = vunpack.c.l.b16 %v795
    %v835 = vunpack.c.l.b16 %v796
    %v836 = vunpack.c.l.b16 %v797
    %v837 = vunpack.c.l.b16 %v798
    %v838 = vunpack.c.l.b16 %v799
    %v839 = vunpack.c.l.b16 %v800
    %v840 = vunpack.c.l.b16 %v801
    %v841 = vunpack.c.l.b16 %v802
    %v842 = vunpack.c.l.b16 %v803
    %v843 = vunpack.c.l.b16 %v804
    %v844 = vunpack.c.l.b16 %v805
    %v845 = vunpack.c.l.b16 %v806
    %v846 = vunpack.c.l.b16 %v807
    %v847 = vpack.c.b16 %v832, %v831
    %v848 = vpack.c.b16 %v834, %v833
    %v849 = vpack.c.b16 %v836, %v835
    %v850 = vpack.c.b16 %v838, %v837
    %v851 = vpack.c.b16 %v840, %v839
    %v852 = vpack.c.b16 %v842, %v841
    %v853 = vpack.c.b16 %v844, %v843
    %v854 = vpack.c.b16 %v846, %v845
    %863 = vmatprep.subr.bf16.mxu0 0
    %864 = vmatpush1.bf16.msra.mxu0 %v854
    %865 = vmatprep.subr.bf16.mxu0 0
    %866 = vmatpush1.bf16.msra.mxu0 %v853
    %867 = vmatprep.subr.bf16.mxu0 0
    %868 = vmatpush1.bf16.msra.mxu0 %v852
    %869 = vmatprep.subr.bf16.mxu0 0
    %870 = vmatpush1.bf16.msra.mxu0 %v851
    %871 = vmatprep.subr.bf16.mxu0 0
    %872 = vmatpush1.bf16.msra.mxu0 %v850
    %873 = vmatprep.subr.bf16.mxu0 0
    %874 = vmatpush1.bf16.msra.mxu0 %v849
    %875 = vmatprep.subr.bf16.mxu0 0
    %876 = vmatpush1.bf16.msra.mxu0 %v848
    %877 = vmatprep.subr.bf16.mxu0 0
    %878 = vmatpush1.bf16.msra.mxu0 %v847
    %879 = vmatprep.subr.bf16.mxu0 0
    %880 = vmatpush2.bf16.msra.mxu0 0
    %881 = vmatprep.subr.bf16.mxu0 0
    %882 = vmatpush2.bf16.msra.mxu0 0
    %883 = vmatprep.subr.bf16.mxu0 0
    %884 = vmatpush2.bf16.msra.mxu0 0
    %885 = vmatprep.subr.bf16.mxu0 0
    %886 = vmatpush2.bf16.msra.mxu0 0
    %887 = vmatprep.subr.bf16.mxu0 0
    %888 = vmatpush2.bf16.msra.mxu0 0
    %889 = vmatprep.subr.bf16.mxu0 0
    %890 = vmatpush2.bf16.msra.mxu0 0
    %891 = vmatprep.subr.bf16.mxu0 0
    %892 = vmatpush2.bf16.msra.mxu0 0
    %893 = vmatprep.subr.bf16.mxu0 0
    %894 = vmatpush2.bf16.msra.mxu0 0
    %895 = vmatprep.mubr.bf16.mxu0 0
    %896 = vmatmul.mubr.bf16.gmra.mxu0 %v784
    %v897 = vpop.f32.mrf.mxu0
    %v898 = vadd.f32 %v813, %v897
    %v899 = vpop.f32.mrf.mxu0
    %v900 = vpop.f32.mrf.mxu0
    %v901 = vadd.f32 %v813, %v900
    %v902 = vpop.f32.mrf.mxu0
    %903 = vmatprep.mubr.bf16.mxu0 0
    %904 = vmatmul.mubr.bf16.gmra.mxu0 %v785
    %v905 = vpop.f32.mrf.mxu0
    %v906 = vadd.f32 %v813, %v905
    %v907 = vpop.f32.mrf.mxu0
    %v908 = vpop.f32.mrf.mxu0
    %v909 = vadd.f32 %v813, %v908
    %v910 = vpop.f32.mrf.mxu0
    %911 = vmatprep.mubr.bf16.mxu0 0
    %912 = vmatmul.mubr.bf16.gmra.mxu0 %v786
    %v913 = vpop.f32.mrf.mxu0
    %v914 = vadd.f32 %v813, %v913
    %v915 = vpop.f32.mrf.mxu0
    %v916 = vpop.f32.mrf.mxu0
    %v917 = vadd.f32 %v813, %v916
    %v918 = vpop.f32.mrf.mxu0
    %919 = vmatprep.mubr.bf16.mxu0 0
    %920 = vmatmul.mubr.bf16.gmra.mxu0 %v787
    %v921 = vpop.f32.mrf.mxu0
    %v922 = vadd.f32 %v813, %v921
    %v923 = vpop.f32.mrf.mxu0
    %v924 = vpop.f32.mrf.mxu0
    %v925 = vadd.f32 %v813, %v924
    %v926 = vpop.f32.mrf.mxu0
    %927 = vmatprep.mubr.bf16.mxu0 0
    %928 = vmatmul.mubr.bf16.gmra.mxu0 %v788
    %v929 = vpop.f32.mrf.mxu0
    %v930 = vadd.f32 %v813, %v929
    %v931 = vpop.f32.mrf.mxu0
    %v932 = vpop.f32.mrf.mxu0
    %v933 = vadd.f32 %v813, %v932
    %v934 = vpop.f32.mrf.mxu0
    %935 = vmatprep.mubr.bf16.mxu0 0
    %936 = vmatmul.mubr.bf16.gmra.mxu0 %v789
    %v937 = vpop.f32.mrf.mxu0
    %v938 = vadd.f32 %v813, %v937
    %v939 = vpop.f32.mrf.mxu0
    %v940 = vpop.f32.mrf.mxu0
    %v941 = vadd.f32 %v813, %v940
    %v942 = vpop.f32.mrf.mxu0
    %943 = vmatprep.mubr.bf16.mxu0 0
    %944 = vmatmul.mubr.bf16.gmra.mxu0 %v790
    %v945 = vpop.f32.mrf.mxu0
    %v946 = vadd.f32 %v813, %v945
    %v947 = vpop.f32.mrf.mxu0
    %v948 = vpop.f32.mrf.mxu0
    %v949 = vadd.f32 %v813, %v948
    %v950 = vpop.f32.mrf.mxu0
    %951 = vmatprep.mubr.bf16.mxu0 0
    %952 = vmatmul.mubr.bf16.gmra.mxu0 %v791
    %v953 = vpop.f32.mrf.mxu0
    %v954 = vadd.f32 %v813, %v953
    %v955 = vpop.f32.mrf.mxu0
    %v956 = vpop.f32.mrf.mxu0
    %v957 = vadd.f32 %v813, %v956
    %v958 = vpop.f32.mrf.mxu0
    %959 = vdwg.mxu0
    %v960 = vmax.f32 %v898, 0.0
    %v961 = vmax.f32 %v901, 0.0
    %v962 = vmax.f32 %v906, 0.0
    %v963 = vmax.f32 %v909, 0.0
    %v964 = vmax.f32 %v914, 0.0
    %v965 = vmax.f32 %v917, 0.0
    %v966 = vmax.f32 %v922, 0.0
    %v967 = vmax.f32 %v925, 0.0
    %v968 = vmax.f32 %v930, 0.0
    %v969 = vmax.f32 %v933, 0.0
    %v970 = vmax.f32 %v938, 0.0
    %v971 = vmax.f32 %v941, 0.0
    %v972 = vmax.f32 %v946, 0.0
    %v973 = vmax.f32 %v949, 0.0
    %v974 = vmax.f32 %v954, 0.0
    %v975 = vmax.f32 %v957, 0.0
    %v976 = vld [vmem:[%s9] sm:$0x1]
    %v978 = vlaneseq
    %v979 = vshrl.u32 %v978, 7
    %v980 = vsub.s32 0, %v979
    %v981 = vrot.slane %v976, %v980
    %v983 = vmul.f32 %v960, %v981
    %v984 = vmul.f32 %v961, %v981
    %v985 = vmul.f32 %v962, %v981
    %v986 = vmul.f32 %v963, %v981
    %v987 = vmul.f32 %v964, %v981
    %v988 = vmul.f32 %v965, %v981
    %v989 = vmul.f32 %v966, %v981
    %v990 = vmul.f32 %v967, %v981
    %v991 = vmul.f32 %v968, %v981
    %v992 = vmul.f32 %v969, %v981
    %v993 = vmul.f32 %v970, %v981
    %v994 = vmul.f32 %v971, %v981
    %v995 = vmul.f32 %v972, %v981
    %v996 = vmul.f32 %v973, %v981
    %v997 = vmul.f32 %v974, %v981
    %v998 = vmul.f32 %v975, %v981
    %v999 = vld [vmem:[%s10] sm:$0x1]
    %v1001 = vlaneseq
    %v1002 = vshrl.u32 %v1001, 7
    %v1003 = vsub.s32 0, %v1002
    %v1004 = vrot.slane %v999, %v1003
    %v1006 = vadd.f32 %v983, %v1004
    %v1007 = vadd.f32 %v984, %v1004
    %v1008 = vadd.f32 %v985, %v1004
    %v1009 = vadd.f32 %v986, %v1004
    %v1010 = vadd.f32 %v987, %v1004
    %v1011 = vadd.f32 %v988, %v1004
    %v1012 = vadd.f32 %v989, %v1004
    %v1013 = vadd.f32 %v990, %v1004
    %v1014 = vadd.f32 %v991, %v1004
    %v1015 = vadd.f32 %v992, %v1004
    %v1016 = vadd.f32 %v993, %v1004
    %v1017 = vadd.f32 %v994, %v1004
    %v1018 = vadd.f32 %v995, %v1004
    %v1019 = vadd.f32 %v996, %v1004
    %v1020 = vadd.f32 %v997, %v1004
    %v1021 = vadd.f32 %v998, %v1004
    %v1022 = vpack.c.bf16 %v1007, %v1006
    %v1023 = vpack.c.bf16 %v1009, %v1008
    %v1024 = vpack.c.bf16 %v1011, %v1010
    %v1025 = vpack.c.bf16 %v1013, %v1012
    %v1026 = vpack.c.bf16 %v1015, %v1014
    %v1027 = vpack.c.bf16 %v1017, %v1016
    %v1028 = vpack.c.bf16 %v1019, %v1018
    %v1029 = vpack.c.bf16 %v1021, %v1020
    %1030 = vmatprep.subr.bf16.mxu0 0
    %1031 = vmatpush1.bf16.msra.mxu0 %v1029
    %1032 = vmatprep.subr.bf16.mxu0 0
    %1033 = vmatpush1.bf16.msra.mxu0 %v1028
    %1034 = vmatprep.subr.bf16.mxu0 0
    %1035 = vmatpush1.bf16.msra.mxu0 %v1027
    %1036 = vmatprep.subr.bf16.mxu0 0
    %1037 = vmatpush1.bf16.msra.mxu0 %v1026
    %1038 = vmatprep.subr.bf16.mxu0 0
    %1039 = vmatpush1.bf16.msra.mxu0 %v1025
    %1040 = vmatprep.subr.bf16.mxu0 0
    %1041 = vmatpush1.bf16.msra.mxu0 %v1024
    %1042 = vmatprep.subr.bf16.mxu0 0
    %1043 = vmatpush1.bf16.msra.mxu0 %v1023
    %1044 = vmatprep.subr.bf16.mxu0 0
    %1045 = vmatpush1.bf16.msra.mxu0 %v1022
    %1046 = vmatprep.subr.bf16.mxu0 0
    %1047 = vmatpush2.bf16.msra.mxu0 0
    %1048 = vmatprep.subr.bf16.mxu0 0
    %1049 = vmatpush2.bf16.msra.mxu0 0
    %1050 = vmatprep.subr.bf16.mxu0 0
    %1051 = vmatpush2.bf16.msra.mxu0 0
    %1052 = vmatprep.subr.bf16.mxu0 0
    %1053 = vmatpush2.bf16.msra.mxu0 0
    %1054 = vmatprep.subr.bf16.mxu0 0
    %1055 = vmatpush2.bf16.msra.mxu0 0
    %1056 = vmatprep.subr.bf16.mxu0 0
    %1057 = vmatpush2.bf16.msra.mxu0 0
    %1058 = vmatprep.subr.bf16.mxu0 0
    %1059 = vmatpush2.bf16.msra.mxu0 0
    %1060 = vmatprep.subr.bf16.mxu0 0
    %1061 = vmatpush2.bf16.msra.mxu0 0
    %1062 = vmatprep.mubr.bf16.mxu0 0
    %1063 = vmatmul.mubr.bf16.gmra.mxu0 %v280
    %v1064 = vpop.f32.mrf.mxu0
    %v1065 = vadd.f32 0.0, %v1064
    %v1066 = vpop.f32.mrf.mxu0
    %v1067 = vpop.f32.mrf.mxu0
    %v1068 = vadd.f32 0.0, %v1067
    %v1069 = vpop.f32.mrf.mxu0
    %1070 = vmatprep.mubr.bf16.mxu0 0
    %1071 = vmatmul.mubr.bf16.gmra.mxu0 %v281
    %v1072 = vpop.f32.mrf.mxu0
    %v1073 = vadd.f32 0.0, %v1072
    %v1074 = vpop.f32.mrf.mxu0
    %v1075 = vpop.f32.mrf.mxu0
    %v1076 = vadd.f32 0.0, %v1075
    %v1077 = vpop.f32.mrf.mxu0
    %1078 = vmatprep.mubr.bf16.mxu0 0
    %1079 = vmatmul.mubr.bf16.gmra.mxu0 %v282
    %v1080 = vpop.f32.mrf.mxu0
    %v1081 = vadd.f32 0.0, %v1080
    %v1082 = vpop.f32.mrf.mxu0
    %v1083 = vpop.f32.mrf.mxu0
    %v1084 = vadd.f32 0.0, %v1083
    %v1085 = vpop.f32.mrf.mxu0
    %1086 = vmatprep.mubr.bf16.mxu0 0
    %1087 = vmatmul.mubr.bf16.gmra.mxu0 %v283
    %v1088 = vpop.f32.mrf.mxu0
    %v1089 = vadd.f32 0.0, %v1088
    %v1090 = vpop.f32.mrf.mxu0
    %v1091 = vpop.f32.mrf.mxu0
    %v1092 = vadd.f32 0.0, %v1091
    %v1093 = vpop.f32.mrf.mxu0
    %1094 = vmatprep.mubr.bf16.mxu0 0
    %1095 = vmatmul.mubr.bf16.gmra.mxu0 %v284
    %v1096 = vpop.f32.mrf.mxu0
    %v1097 = vadd.f32 0.0, %v1096
    %v1098 = vpop.f32.mrf.mxu0
    %v1099 = vpop.f32.mrf.mxu0
    %v1100 = vadd.f32 0.0, %v1099
    %v1101 = vpop.f32.mrf.mxu0
    %1102 = vmatprep.mubr.bf16.mxu0 0
    %1103 = vmatmul.mubr.bf16.gmra.mxu0 %v285
    %v1104 = vpop.f32.mrf.mxu0
    %v1105 = vadd.f32 0.0, %v1104
    %v1106 = vpop.f32.mrf.mxu0
    %v1107 = vpop.f32.mrf.mxu0
    %v1108 = vadd.f32 0.0, %v1107
    %v1109 = vpop.f32.mrf.mxu0
    %1110 = vmatprep.mubr.bf16.mxu0 0
    %1111 = vmatmul.mubr.bf16.gmra.mxu0 %v286
    %v1112 = vpop.f32.mrf.mxu0
    %v1113 = vadd.f32 0.0, %v1112
    %v1114 = vpop.f32.mrf.mxu0
    %v1115 = vpop.f32.mrf.mxu0
    %v1116 = vadd.f32 0.0, %v1115
    %v1117 = vpop.f32.mrf.mxu0
    %1118 = vmatprep.mubr.bf16.mxu0 0
    %1119 = vmatmul.mubr.bf16.gmra.mxu0 %v287
    %v1120 = vpop.f32.mrf.mxu0
    %v1121 = vadd.f32 0.0, %v1120
    %v1122 = vpop.f32.mrf.mxu0
    %v1123 = vpop.f32.mrf.mxu0
    %v1124 = vadd.f32 0.0, %v1123
    %v1125 = vpop.f32.mrf.mxu0
    %1126 = vdwg.mxu0
    %v1127 = vpack.c.bf16 %v1068, %v1065
    %v1128 = vpack.c.bf16 %v1076, %v1073
    %v1129 = vpack.c.bf16 %v1084, %v1081
    %v1130 = vpack.c.bf16 %v1092, %v1089
    %v1131 = vpack.c.bf16 %v1100, %v1097
    %v1132 = vpack.c.bf16 %v1108, %v1105
    %v1133 = vpack.c.bf16 %v1116, %v1113
    %v1134 = vpack.c.bf16 %v1124, %v1121
    %v1135 = vld [vmem:[#allocation11] sm:$0xf]
    %v1136 = vld [vmem:[#allocation11 + $0x4] sm:$0xf]
    %v1137 = vld [vmem:[#allocation11 + $0x8] sm:$0xf]
    %v1138 = vld [vmem:[#allocation11 + $0xc] sm:$0xf]
    %v1139 = vld [vmem:[#allocation11 + $0x10] sm:$0xf]
    %v1140 = vld [vmem:[#allocation11 + $0x14] sm:$0xf]
    %v1141 = vld [vmem:[#allocation11 + $0x18] sm:$0xf]
    %v1142 = vld [vmem:[#allocation11 + $0x1c] sm:$0xf]
    %v1143 = vld [vmem:[#allocation11 + $0x20] sm:$0xf]
    %v1144 = vld [vmem:[#allocation11 + $0x24] sm:$0xf]
    %v1145 = vld [vmem:[#allocation11 + $0x28] sm:$0xf]
    %v1146 = vld [vmem:[#allocation11 + $0x2c] sm:$0xf]
    %v1147 = vld [vmem:[#allocation11 + $0x30] sm:$0xf]
    %v1148 = vld [vmem:[#allocation11 + $0x34] sm:$0xf]
    %v1149 = vld [vmem:[#allocation11 + $0x38] sm:$0xf]
    %v1150 = vld [vmem:[#allocation11 + $0x3c] sm:$0xf]
    %v1151 = vld [vmem:[%s12] sm:$0x1]
    %v1153 = vlaneseq
    %v1154 = vshrl.u32 %v1153, 7
    %v1155 = vsub.s32 0, %v1154
    %v1156 = vrot.slane %v1151, %v1155
    %v1174 = vunpack.c.l.b16 %v1135
    %v1175 = vunpack.c.l.b16 %v1136
    %v1176 = vunpack.c.l.b16 %v1137
    %v1177 = vunpack.c.l.b16 %v1138
    %v1178 = vunpack.c.l.b16 %v1139
    %v1179 = vunpack.c.l.b16 %v1140
    %v1180 = vunpack.c.l.b16 %v1141
    %v1181 = vunpack.c.l.b16 %v1142
    %v1182 = vunpack.c.l.b16 %v1143
    %v1183 = vunpack.c.l.b16 %v1144
    %v1184 = vunpack.c.l.b16 %v1145
    %v1185 = vunpack.c.l.b16 %v1146
    %v1186 = vunpack.c.l.b16 %v1147
    %v1187 = vunpack.c.l.b16 %v1148
    %v1188 = vunpack.c.l.b16 %v1149
    %v1189 = vunpack.c.l.b16 %v1150
    %v1190 = vpack.c.b16 %v1175, %v1174
    %v1191 = vpack.c.b16 %v1177, %v1176
    %v1192 = vpack.c.b16 %v1179, %v1178
    %v1193 = vpack.c.b16 %v1181, %v1180
    %v1194 = vpack.c.b16 %v1183, %v1182
    %v1195 = vpack.c.b16 %v1185, %v1184
    %v1196 = vpack.c.b16 %v1187, %v1186
    %v1197 = vpack.c.b16 %v1189, %v1188
    %1206 = vmatprep.subr.bf16.mxu0 0
    %1207 = vmatpush1.bf16.msra.mxu0 %v1197
    %1208 = vmatprep.subr.bf16.mxu0 0
    %1209 = vmatpush1.bf16.msra.mxu0 %v1196
    %1210 = vmatprep.subr.bf16.mxu0 0
    %1211 = vmatpush1.bf16.msra.mxu0 %v1195
    %1212 = vmatprep.subr.bf16.mxu0 0
    %1213 = vmatpush1.bf16.msra.mxu0 %v1194
    %1214 = vmatprep.subr.bf16.mxu0 0
    %1215 = vmatpush1.bf16.msra.mxu0 %v1193
    %1216 = vmatprep.subr.bf16.mxu0 0
    %1217 = vmatpush1.bf16.msra.mxu0 %v1192
    %1218 = vmatprep.subr.bf16.mxu0 0
    %1219 = vmatpush1.bf16.msra.mxu0 %v1191
    %1220 = vmatprep.subr.bf16.mxu0 0
    %1221 = vmatpush1.bf16.msra.mxu0 %v1190
    %1222 = vmatprep.subr.bf16.mxu0 0
    %1223 = vmatpush2.bf16.msra.mxu0 0
    %1224 = vmatprep.subr.bf16.mxu0 0
    %1225 = vmatpush2.bf16.msra.mxu0 0
    %1226 = vmatprep.subr.bf16.mxu0 0
    %1227 = vmatpush2.bf16.msra.mxu0 0
    %1228 = vmatprep.subr.bf16.mxu0 0
    %1229 = vmatpush2.bf16.msra.mxu0 0
    %1230 = vmatprep.subr.bf16.mxu0 0
    %1231 = vmatpush2.bf16.msra.mxu0 0
    %1232 = vmatprep.subr.bf16.mxu0 0
    %1233 = vmatpush2.bf16.msra.mxu0 0
    %1234 = vmatprep.subr.bf16.mxu0 0
    %1235 = vmatpush2.bf16.msra.mxu0 0
    %1236 = vmatprep.subr.bf16.mxu0 0
    %1237 = vmatpush2.bf16.msra.mxu0 0
    %1238 = vmatprep.mubr.bf16.mxu0 0
    %1239 = vmatmul.mubr.bf16.gmra.mxu0 %v1127
    %v1240 = vpop.f32.mrf.mxu0
    %v1241 = vadd.f32 %v1156, %v1240
    %v1242 = vpop.f32.mrf.mxu0
    %v1243 = vpop.f32.mrf.mxu0
    %v1244 = vadd.f32 %v1156, %v1243
    %v1245 = vpop.f32.mrf.mxu0
    %1246 = vmatprep.mubr.bf16.mxu0 0
    %1247 = vmatmul.mubr.bf16.gmra.mxu0 %v1128
    %v1248 = vpop.f32.mrf.mxu0
    %v1249 = vadd.f32 %v1156, %v1248
    %v1250 = vpop.f32.mrf.mxu0
    %v1251 = vpop.f32.mrf.mxu0
    %v1252 = vadd.f32 %v1156, %v1251
    %v1253 = vpop.f32.mrf.mxu0
    %1254 = vmatprep.mubr.bf16.mxu0 0
    %1255 = vmatmul.mubr.bf16.gmra.mxu0 %v1129
    %v1256 = vpop.f32.mrf.mxu0
    %v1257 = vadd.f32 %v1156, %v1256
    %v1258 = vpop.f32.mrf.mxu0
    %v1259 = vpop.f32.mrf.mxu0
    %v1260 = vadd.f32 %v1156, %v1259
    %v1261 = vpop.f32.mrf.mxu0
    %1262 = vmatprep.mubr.bf16.mxu0 0
    %1263 = vmatmul.mubr.bf16.gmra.mxu0 %v1130
    %v1264 = vpop.f32.mrf.mxu0
    %v1265 = vadd.f32 %v1156, %v1264
    %v1266 = vpop.f32.mrf.mxu0
    %v1267 = vpop.f32.mrf.mxu0
    %v1268 = vadd.f32 %v1156, %v1267
    %v1269 = vpop.f32.mrf.mxu0
    %1270 = vmatprep.mubr.bf16.mxu0 0
    %1271 = vmatmul.mubr.bf16.gmra.mxu0 %v1131
    %v1272 = vpop.f32.mrf.mxu0
    %v1273 = vadd.f32 %v1156, %v1272
    %v1274 = vpop.f32.mrf.mxu0
    %v1275 = vpop.f32.mrf.mxu0
    %v1276 = vadd.f32 %v1156, %v1275
    %v1277 = vpop.f32.mrf.mxu0
    %1278 = vmatprep.mubr.bf16.mxu0 0
    %1279 = vmatmul.mubr.bf16.gmra.mxu0 %v1132
    %v1280 = vpop.f32.mrf.mxu0
    %v1281 = vadd.f32 %v1156, %v1280
    %v1282 = vpop.f32.mrf.mxu0
    %v1283 = vpop.f32.mrf.mxu0
    %v1284 = vadd.f32 %v1156, %v1283
    %v1285 = vpop.f32.mrf.mxu0
    %1286 = vmatprep.mubr.bf16.mxu0 0
    %1287 = vmatmul.mubr.bf16.gmra.mxu0 %v1133
    %v1288 = vpop.f32.mrf.mxu0
    %v1289 = vadd.f32 %v1156, %v1288
    %v1290 = vpop.f32.mrf.mxu0
    %v1291 = vpop.f32.mrf.mxu0
    %v1292 = vadd.f32 %v1156, %v1291
    %v1293 = vpop.f32.mrf.mxu0
    %1294 = vmatprep.mubr.bf16.mxu0 0
    %1295 = vmatmul.mubr.bf16.gmra.mxu0 %v1134
    %v1296 = vpop.f32.mrf.mxu0
    %v1297 = vadd.f32 %v1156, %v1296
    %v1298 = vpop.f32.mrf.mxu0
    %v1299 = vpop.f32.mrf.mxu0
    %v1300 = vadd.f32 %v1156, %v1299
    %v1301 = vpop.f32.mrf.mxu0
    %1302 = vdwg.mxu0
    %v1303 = vmax.f32 %v1241, 0.0
    %v1304 = vmax.f32 %v1244, 0.0
    %v1305 = vmax.f32 %v1249, 0.0
    %v1306 = vmax.f32 %v1252, 0.0
    %v1307 = vmax.f32 %v1257, 0.0
    %v1308 = vmax.f32 %v1260, 0.0
    %v1309 = vmax.f32 %v1265, 0.0
    %v1310 = vmax.f32 %v1268, 0.0
    %v1311 = vmax.f32 %v1273, 0.0
    %v1312 = vmax.f32 %v1276, 0.0
    %v1313 = vmax.f32 %v1281, 0.0
    %v1314 = vmax.f32 %v1284, 0.0
    %v1315 = vmax.f32 %v1289, 0.0
    %v1316 = vmax.f32 %v1292, 0.0
    %v1317 = vmax.f32 %v1297, 0.0
    %v1318 = vmax.f32 %v1300, 0.0
    %v1319 = vld [vmem:[%s13] sm:$0x1]
    %v1321 = vlaneseq
    %v1322 = vshrl.u32 %v1321, 7
    %v1323 = vsub.s32 0, %v1322
    %v1324 = vrot.slane %v1319, %v1323
    %v1326 = vmul.f32 %v1303, %v1324
    %v1327 = vmul.f32 %v1304, %v1324
    %v1328 = vmul.f32 %v1305, %v1324
    %v1329 = vmul.f32 %v1306, %v1324
    %v1330 = vmul.f32 %v1307, %v1324
    %v1331 = vmul.f32 %v1308, %v1324
    %v1332 = vmul.f32 %v1309, %v1324
    %v1333 = vmul.f32 %v1310, %v1324
    %v1334 = vmul.f32 %v1311, %v1324
    %v1335 = vmul.f32 %v1312, %v1324
    %v1336 = vmul.f32 %v1313, %v1324
    %v1337 = vmul.f32 %v1314, %v1324
    %v1338 = vmul.f32 %v1315, %v1324
    %v1339 = vmul.f32 %v1316, %v1324
    %v1340 = vmul.f32 %v1317, %v1324
    %v1341 = vmul.f32 %v1318, %v1324
    %v1342 = vld [vmem:[%s14] sm:$0x1]
    %v1344 = vlaneseq
    %v1345 = vshrl.u32 %v1344, 7
    %v1346 = vsub.s32 0, %v1345
    %v1347 = vrot.slane %v1342, %v1346
    %v1349 = vadd.f32 %v1326, %v1347
    %v1350 = vadd.f32 %v1327, %v1347
    %v1351 = vadd.f32 %v1328, %v1347
    %v1352 = vadd.f32 %v1329, %v1347
    %v1353 = vadd.f32 %v1330, %v1347
    %v1354 = vadd.f32 %v1331, %v1347
    %v1355 = vadd.f32 %v1332, %v1347
    %v1356 = vadd.f32 %v1333, %v1347
    %v1357 = vadd.f32 %v1334, %v1347
    %v1358 = vadd.f32 %v1335, %v1347
    %v1359 = vadd.f32 %v1336, %v1347
    %v1360 = vadd.f32 %v1337, %v1347
    %v1361 = vadd.f32 %v1338, %v1347
    %v1362 = vadd.f32 %v1339, %v1347
    %v1363 = vadd.f32 %v1340, %v1347
    %v1364 = vadd.f32 %v1341, %v1347
    %v1365 = vpack.c.bf16 %v1350, %v1349
    %v1366 = vpack.c.bf16 %v1352, %v1351
    %v1367 = vpack.c.bf16 %v1354, %v1353
    %v1368 = vpack.c.bf16 %v1356, %v1355
    %v1369 = vpack.c.bf16 %v1358, %v1357
    %v1370 = vpack.c.bf16 %v1360, %v1359
    %v1371 = vpack.c.bf16 %v1362, %v1361
    %v1372 = vpack.c.bf16 %v1364, %v1363
    %1373 = vmatprep.subr.bf16.mxu0 0
    %1374 = vmatpush1.bf16.msra.mxu0 %v1372
    %1375 = vmatprep.subr.bf16.mxu0 0
    %1376 = vmatpush1.bf16.msra.mxu0 %v1371
    %1377 = vmatprep.subr.bf16.mxu0 0
    %1378 = vmatpush1.bf16.msra.mxu0 %v1370
    %1379 = vmatprep.subr.bf16.mxu0 0
    %1380 = vmatpush1.bf16.msra.mxu0 %v1369
    %1381 = vmatprep.subr.bf16.mxu0 0
    %1382 = vmatpush1.bf16.msra.mxu0 %v1368
    %1383 = vmatprep.subr.bf16.mxu0 0
    %1384 = vmatpush1.bf16.msra.mxu0 %v1367
    %1385 = vmatprep.subr.bf16.mxu0 0
    %1386 = vmatpush1.bf16.msra.mxu0 %v1366
    %1387 = vmatprep.subr.bf16.mxu0 0
    %1388 = vmatpush1.bf16.msra.mxu0 %v1365
    %1389 = vmatprep.subr.bf16.mxu0 0
    %1390 = vmatpush2.bf16.msra.mxu0 0
    %1391 = vmatprep.subr.bf16.mxu0 0
    %1392 = vmatpush2.bf16.msra.mxu0 0
    %1393 = vmatprep.subr.bf16.mxu0 0
    %1394 = vmatpush2.bf16.msra.mxu0 0
    %1395 = vmatprep.subr.bf16.mxu0 0
    %1396 = vmatpush2.bf16.msra.mxu0 0
    %1397 = vmatprep.subr.bf16.mxu0 0
    %1398 = vmatpush2.bf16.msra.mxu0 0
    %1399 = vmatprep.subr.bf16.mxu0 0
    %1400 = vmatpush2.bf16.msra.mxu0 0
    %1401 = vmatprep.subr.bf16.mxu0 0
    %1402 = vmatpush2.bf16.msra.mxu0 0
    %1403 = vmatprep.subr.bf16.mxu0 0
    %1404 = vmatpush2.bf16.msra.mxu0 0
    %1405 = vmatprep.mubr.bf16.mxu0 0
    %1406 = vmatmul.mubr.bf16.gmra.mxu0 %v280
    %v1407 = vpop.f32.mrf.mxu0
    %v1408 = vadd.f32 0.0, %v1407
    %v1409 = vpop.f32.mrf.mxu0
    %v1410 = vpop.f32.mrf.mxu0
    %v1411 = vadd.f32 0.0, %v1410
    %v1412 = vpop.f32.mrf.mxu0
    %1413 = vmatprep.mubr.bf16.mxu0 0
    %1414 = vmatmul.mubr.bf16.gmra.mxu0 %v281
    %v1415 = vpop.f32.mrf.mxu0
    %v1416 = vadd.f32 0.0, %v1415
    %v1417 = vpop.f32.mrf.mxu0
    %v1418 = vpop.f32.mrf.mxu0
    %v1419 = vadd.f32 0.0, %v1418
    %v1420 = vpop.f32.mrf.mxu0
    %1421 = vmatprep.mubr.bf16.mxu0 0
    %1422 = vmatmul.mubr.bf16.gmra.mxu0 %v282
    %v1423 = vpop.f32.mrf.mxu0
    %v1424 = vadd.f32 0.0, %v1423
    %v1425 = vpop.f32.mrf.mxu0
    %v1426 = vpop.f32.mrf.mxu0
    %v1427 = vadd.f32 0.0, %v1426
    %v1428 = vpop.f32.mrf.mxu0
    %1429 = vmatprep.mubr.bf16.mxu0 0
    %1430 = vmatmul.mubr.bf16.gmra.mxu0 %v283
    %v1431 = vpop.f32.mrf.mxu0
    %v1432 = vadd.f32 0.0, %v1431
    %v1433 = vpop.f32.mrf.mxu0
    %v1434 = vpop.f32.mrf.mxu0
    %v1435 = vadd.f32 0.0, %v1434
    %v1436 = vpop.f32.mrf.mxu0
    %1437 = vmatprep.mubr.bf16.mxu0 0
    %1438 = vmatmul.mubr.bf16.gmra.mxu0 %v284
    %v1439 = vpop.f32.mrf.mxu0
    %v1440 = vadd.f32 0.0, %v1439
    %v1441 = vpop.f32.mrf.mxu0
    %v1442 = vpop.f32.mrf.mxu0
    %v1443 = vadd.f32 0.0, %v1442
    %v1444 = vpop.f32.mrf.mxu0
    %1445 = vmatprep.mubr.bf16.mxu0 0
    %1446 = vmatmul.mubr.bf16.gmra.mxu0 %v285
    %v1447 = vpop.f32.mrf.mxu0
    %v1448 = vadd.f32 0.0, %v1447
    %v1449 = vpop.f32.mrf.mxu0
    %v1450 = vpop.f32.mrf.mxu0
    %v1451 = vadd.f32 0.0, %v1450
    %v1452 = vpop.f32.mrf.mxu0
    %1453 = vmatprep.mubr.bf16.mxu0 0
    %1454 = vmatmul.mubr.bf16.gmra.mxu0 %v286
    %v1455 = vpop.f32.mrf.mxu0
    %v1456 = vadd.f32 0.0, %v1455
    %v1457 = vpop.f32.mrf.mxu0
    %v1458 = vpop.f32.mrf.mxu0
    %v1459 = vadd.f32 0.0, %v1458
    %v1460 = vpop.f32.mrf.mxu0
    %1461 = vmatprep.mubr.bf16.mxu0 0
    %1462 = vmatmul.mubr.bf16.gmra.mxu0 %v287
    %v1463 = vpop.f32.mrf.mxu0
    %v1464 = vadd.f32 0.0, %v1463
    %v1465 = vpop.f32.mrf.mxu0
    %v1466 = vpop.f32.mrf.mxu0
    %v1467 = vadd.f32 0.0, %v1466
    %v1468 = vpop.f32.mrf.mxu0
    %1469 = vdwg.mxu0
    %v1470 = vpack.c.bf16 %v1411, %v1408
    %v1471 = vpack.c.bf16 %v1419, %v1416
    %v1472 = vpack.c.bf16 %v1427, %v1424
    %v1473 = vpack.c.bf16 %v1435, %v1432
    %v1474 = vpack.c.bf16 %v1443, %v1440
    %v1475 = vpack.c.bf16 %v1451, %v1448
    %v1476 = vpack.c.bf16 %v1459, %v1456
    %v1477 = vpack.c.bf16 %v1467, %v1464
    %v1478 = vld [vmem:[#allocation13] sm:$0xf]
    %v1479 = vld [vmem:[#allocation13 + $0x4] sm:$0xf]
    %v1480 = vld [vmem:[#allocation13 + $0x8] sm:$0xf]
    %v1481 = vld [vmem:[#allocation13 + $0xc] sm:$0xf]
    %v1482 = vld [vmem:[#allocation13 + $0x10] sm:$0xf]
    %v1483 = vld [vmem:[#allocation13 + $0x14] sm:$0xf]
    %v1484 = vld [vmem:[#allocation13 + $0x18] sm:$0xf]
    %v1485 = vld [vmem:[#allocation13 + $0x1c] sm:$0xf]
    %v1486 = vld [vmem:[#allocation13 + $0x20] sm:$0xf]
    %v1487 = vld [vmem:[#allocation13 + $0x24] sm:$0xf]
    %v1488 = vld [vmem:[#allocation13 + $0x28] sm:$0xf]
    %v1489 = vld [vmem:[#allocation13 + $0x2c] sm:$0xf]
    %v1490 = vld [vmem:[#allocation13 + $0x30] sm:$0xf]
    %v1491 = vld [vmem:[#allocation13 + $0x34] sm:$0xf]
    %v1492 = vld [vmem:[#allocation13 + $0x38] sm:$0xf]
    %v1493 = vld [vmem:[#allocation13 + $0x3c] sm:$0xf]
    %v1494 = vld [vmem:[%s16] sm:$0x1]
    %v1496 = vlaneseq
    %v1497 = vshrl.u32 %v1496, 7
    %v1498 = vsub.s32 0, %v1497
    %v1499 = vrot.slane %v1494, %v1498
    %v1517 = vunpack.c.l.b16 %v1478
    %v1518 = vunpack.c.l.b16 %v1479
    %v1519 = vunpack.c.l.b16 %v1480
    %v1520 = vunpack.c.l.b16 %v1481
    %v1521 = vunpack.c.l.b16 %v1482
    %v1522 = vunpack.c.l.b16 %v1483
    %v1523 = vunpack.c.l.b16 %v1484
    %v1524 = vunpack.c.l.b16 %v1485
    %v1525 = vunpack.c.l.b16 %v1486
    %v1526 = vunpack.c.l.b16 %v1487
    %v1527 = vunpack.c.l.b16 %v1488
    %v1528 = vunpack.c.l.b16 %v1489
    %v1529 = vunpack.c.l.b16 %v1490
    %v1530 = vunpack.c.l.b16 %v1491
    %v1531 = vunpack.c.l.b16 %v1492
    %v1532 = vunpack.c.l.b16 %v1493
    %v1533 = vpack.c.b16 %v1518, %v1517
    %v1534 = vpack.c.b16 %v1520, %v1519
    %v1535 = vpack.c.b16 %v1522, %v1521
    %v1536 = vpack.c.b16 %v1524, %v1523
    %v1537 = vpack.c.b16 %v1526, %v1525
    %v1538 = vpack.c.b16 %v1528, %v1527
    %v1539 = vpack.c.b16 %v1530, %v1529
    %v1540 = vpack.c.b16 %v1532, %v1531
    %1549 = vmatprep.subr.bf16.mxu0 0
    %1550 = vmatpush1.bf16.msra.mxu0 %v1540
    %1551 = vmatprep.subr.bf16.mxu0 0
    %1552 = vmatpush1.bf16.msra.mxu0 %v1539
    %1553 = vmatprep.subr.bf16.mxu0 0
    %1554 = vmatpush1.bf16.msra.mxu0 %v1538
    %1555 = vmatprep.subr.bf16.mxu0 0
    %1556 = vmatpush1.bf16.msra.mxu0 %v1537
    %1557 = vmatprep.subr.bf16.mxu0 0
    %1558 = vmatpush1.bf16.msra.mxu0 %v1536
    %1559 = vmatprep.subr.bf16.mxu0 0
    %1560 = vmatpush1.bf16.msra.mxu0 %v1535
    %1561 = vmatprep.subr.bf16.mxu0 0
    %1562 = vmatpush1.bf16.msra.mxu0 %v1534
    %1563 = vmatprep.subr.bf16.mxu0 0
    %1564 = vmatpush1.bf16.msra.mxu0 %v1533
    %1565 = vmatprep.subr.bf16.mxu0 0
    %1566 = vmatpush2.bf16.msra.mxu0 0
    %1567 = vmatprep.subr.bf16.mxu0 0
    %1568 = vmatpush2.bf16.msra.mxu0 0
    %1569 = vmatprep.subr.bf16.mxu0 0
    %1570 = vmatpush2.bf16.msra.mxu0 0
    %1571 = vmatprep.subr.bf16.mxu0 0
    %1572 = vmatpush2.bf16.msra.mxu0 0
    %1573 = vmatprep.subr.bf16.mxu0 0
    %1574 = vmatpush2.bf16.msra.mxu0 0
    %1575 = vmatprep.subr.bf16.mxu0 0
    %1576 = vmatpush2.bf16.msra.mxu0 0
    %1577 = vmatprep.subr.bf16.mxu0 0
    %1578 = vmatpush2.bf16.msra.mxu0 0
    %1579 = vmatprep.subr.bf16.mxu0 0
    %1580 = vmatpush2.bf16.msra.mxu0 0
    %1581 = vmatprep.mubr.bf16.mxu0 0
    %1582 = vmatmul.mubr.bf16.gmra.mxu0 %v1470
    %v1583 = vpop.f32.mrf.mxu0
    %v1584 = vadd.f32 %v1499, %v1583
    %v1585 = vpop.f32.mrf.mxu0
    %v1586 = vpop.f32.mrf.mxu0
    %v1587 = vadd.f32 %v1499, %v1586
    %v1588 = vpop.f32.mrf.mxu0
    %1589 = vmatprep.mubr.bf16.mxu0 0
    %1590 = vmatmul.mubr.bf16.gmra.mxu0 %v1471
    %v1591 = vpop.f32.mrf.mxu0
    %v1592 = vadd.f32 %v1499, %v1591
    %v1593 = vpop.f32.mrf.mxu0
    %v1594 = vpop.f32.mrf.mxu0
    %v1595 = vadd.f32 %v1499, %v1594
    %v1596 = vpop.f32.mrf.mxu0
    %1597 = vmatprep.mubr.bf16.mxu0 0
    %1598 = vmatmul.mubr.bf16.gmra.mxu0 %v1472
    %v1599 = vpop.f32.mrf.mxu0
    %v1600 = vadd.f32 %v1499, %v1599
    %v1601 = vpop.f32.mrf.mxu0
    %v1602 = vpop.f32.mrf.mxu0
    %v1603 = vadd.f32 %v1499, %v1602
    %v1604 = vpop.f32.mrf.mxu0
    %1605 = vmatprep.mubr.bf16.mxu0 0
    %1606 = vmatmul.mubr.bf16.gmra.mxu0 %v1473
    %v1607 = vpop.f32.mrf.mxu0
    %v1608 = vadd.f32 %v1499, %v1607
    %v1609 = vpop.f32.mrf.mxu0
    %v1610 = vpop.f32.mrf.mxu0
    %v1611 = vadd.f32 %v1499, %v1610
    %v1612 = vpop.f32.mrf.mxu0
    %1613 = vmatprep.mubr.bf16.mxu0 0
    %1614 = vmatmul.mubr.bf16.gmra.mxu0 %v1474
    %v1615 = vpop.f32.mrf.mxu0
    %v1616 = vadd.f32 %v1499, %v1615
    %v1617 = vpop.f32.mrf.mxu0
    %v1618 = vpop.f32.mrf.mxu0
    %v1619 = vadd.f32 %v1499, %v1618
    %v1620 = vpop.f32.mrf.mxu0
    %1621 = vmatprep.mubr.bf16.mxu0 0
    %1622 = vmatmul.mubr.bf16.gmra.mxu0 %v1475
    %v1623 = vpop.f32.mrf.mxu0
    %v1624 = vadd.f32 %v1499, %v1623
    %v1625 = vpop.f32.mrf.mxu0
    %v1626 = vpop.f32.mrf.mxu0
    %v1627 = vadd.f32 %v1499, %v1626
    %v1628 = vpop.f32.mrf.mxu0
    %1629 = vmatprep.mubr.bf16.mxu0 0
    %1630 = vmatmul.mubr.bf16.gmra.mxu0 %v1476
    %v1631 = vpop.f32.mrf.mxu0
    %v1632 = vadd.f32 %v1499, %v1631
    %v1633 = vpop.f32.mrf.mxu0
    %v1634 = vpop.f32.mrf.mxu0
    %v1635 = vadd.f32 %v1499, %v1634
    %v1636 = vpop.f32.mrf.mxu0
    %1637 = vmatprep.mubr.bf16.mxu0 0
    %1638 = vmatmul.mubr.bf16.gmra.mxu0 %v1477
    %v1639 = vpop.f32.mrf.mxu0
    %v1640 = vadd.f32 %v1499, %v1639
    %v1641 = vpop.f32.mrf.mxu0
    %v1642 = vpop.f32.mrf.mxu0
    %v1643 = vadd.f32 %v1499, %v1642
    %v1644 = vpop.f32.mrf.mxu0
    %1645 = vdwg.mxu0
    %v1646 = vmax.f32 %v1584, 0.0
    %v1647 = vmax.f32 %v1587, 0.0
    %v1648 = vmax.f32 %v1592, 0.0
    %v1649 = vmax.f32 %v1595, 0.0
    %v1650 = vmax.f32 %v1600, 0.0
    %v1651 = vmax.f32 %v1603, 0.0
    %v1652 = vmax.f32 %v1608, 0.0
    %v1653 = vmax.f32 %v1611, 0.0
    %v1654 = vmax.f32 %v1616, 0.0
    %v1655 = vmax.f32 %v1619, 0.0
    %v1656 = vmax.f32 %v1624, 0.0
    %v1657 = vmax.f32 %v1627, 0.0
    %v1658 = vmax.f32 %v1632, 0.0
    %v1659 = vmax.f32 %v1635, 0.0
    %v1660 = vmax.f32 %v1640, 0.0
    %v1661 = vmax.f32 %v1643, 0.0
    %v1662 = vpack.c.bf16 %v1647, %v1646
    %v1663 = vpack.c.bf16 %v1649, %v1648
    %v1664 = vpack.c.bf16 %v1651, %v1650
    %v1665 = vpack.c.bf16 %v1653, %v1652
    %v1666 = vpack.c.bf16 %v1655, %v1654
    %v1667 = vpack.c.bf16 %v1657, %v1656
    %v1668 = vpack.c.bf16 %v1659, %v1658
    %v1669 = vpack.c.bf16 %v1661, %v1660
    %1670 = vmatprep.subr.bf16.mxu0 0
    %1671 = vmatpush1.bf16.msra.mxu0 %v1669
    %1672 = vmatprep.subr.bf16.mxu0 0
    %1673 = vmatpush1.bf16.msra.mxu0 %v1668
    %1674 = vmatprep.subr.bf16.mxu0 0
    %1675 = vmatpush1.bf16.msra.mxu0 %v1667
    %1676 = vmatprep.subr.bf16.mxu0 0
    %1677 = vmatpush1.bf16.msra.mxu0 %v1666
    %1678 = vmatprep.subr.bf16.mxu0 0
    %1679 = vmatpush1.bf16.msra.mxu0 %v1665
    %1680 = vmatprep.subr.bf16.mxu0 0
    %1681 = vmatpush1.bf16.msra.mxu0 %v1664
    %1682 = vmatprep.subr.bf16.mxu0 0
    %1683 = vmatpush1.bf16.msra.mxu0 %v1663
    %1684 = vmatprep.subr.bf16.mxu0 0
    %1685 = vmatpush1.bf16.msra.mxu0 %v1662
    %1686 = vmatprep.subr.bf16.mxu0 0
    %1687 = vmatpush2.bf16.msra.mxu0 0
    %1688 = vmatprep.subr.bf16.mxu0 0
    %1689 = vmatpush2.bf16.msra.mxu0 0
    %1690 = vmatprep.subr.bf16.mxu0 0
    %1691 = vmatpush2.bf16.msra.mxu0 0
    %1692 = vmatprep.subr.bf16.mxu0 0
    %1693 = vmatpush2.bf16.msra.mxu0 0
    %1694 = vmatprep.subr.bf16.mxu0 0
    %1695 = vmatpush2.bf16.msra.mxu0 0
    %1696 = vmatprep.subr.bf16.mxu0 0
    %1697 = vmatpush2.bf16.msra.mxu0 0
    %1698 = vmatprep.subr.bf16.mxu0 0
    %1699 = vmatpush2.bf16.msra.mxu0 0
    %1700 = vmatprep.subr.bf16.mxu0 0
    %1701 = vmatpush2.bf16.msra.mxu0 0
    %1702 = vmatprep.mubr.bf16.mxu0 0
    %1703 = vmatmul.mubr.bf16.gmra.mxu0 %v280
    %v1704 = vpop.f32.mrf.mxu0
    %v1705 = vadd.f32 0.0, %v1704
    %v1706 = vpop.f32.mrf.mxu0
    %v1707 = vpop.f32.mrf.mxu0
    %v1708 = vadd.f32 0.0, %v1707
    %v1709 = vpop.f32.mrf.mxu0
    %1710 = vmatprep.mubr.bf16.mxu0 0
    %1711 = vmatmul.mubr.bf16.gmra.mxu0 %v281
    %v1712 = vpop.f32.mrf.mxu0
    %v1713 = vadd.f32 0.0, %v1712
    %v1714 = vpop.f32.mrf.mxu0
    %v1715 = vpop.f32.mrf.mxu0
    %v1716 = vadd.f32 0.0, %v1715
    %v1717 = vpop.f32.mrf.mxu0
    %1718 = vmatprep.mubr.bf16.mxu0 0
    %1719 = vmatmul.mubr.bf16.gmra.mxu0 %v282
    %v1720 = vpop.f32.mrf.mxu0
    %v1721 = vadd.f32 0.0, %v1720
    %v1722 = vpop.f32.mrf.mxu0
    %v1723 = vpop.f32.mrf.mxu0
    %v1724 = vadd.f32 0.0, %v1723
    %v1725 = vpop.f32.mrf.mxu0
    %1726 = vmatprep.mubr.bf16.mxu0 0
    %1727 = vmatmul.mubr.bf16.gmra.mxu0 %v283
    %v1728 = vpop.f32.mrf.mxu0
    %v1729 = vadd.f32 0.0, %v1728
    %v1730 = vpop.f32.mrf.mxu0
    %v1731 = vpop.f32.mrf.mxu0
    %v1732 = vadd.f32 0.0, %v1731
    %v1733 = vpop.f32.mrf.mxu0
    %1734 = vmatprep.mubr.bf16.mxu0 0
    %1735 = vmatmul.mubr.bf16.gmra.mxu0 %v284
    %v1736 = vpop.f32.mrf.mxu0
    %v1737 = vadd.f32 0.0, %v1736
    %v1738 = vpop.f32.mrf.mxu0
    %v1739 = vpop.f32.mrf.mxu0
    %v1740 = vadd.f32 0.0, %v1739
    %v1741 = vpop.f32.mrf.mxu0
    %1742 = vmatprep.mubr.bf16.mxu0 0
    %1743 = vmatmul.mubr.bf16.gmra.mxu0 %v285
    %v1744 = vpop.f32.mrf.mxu0
    %v1745 = vadd.f32 0.0, %v1744
    %v1746 = vpop.f32.mrf.mxu0
    %v1747 = vpop.f32.mrf.mxu0
    %v1748 = vadd.f32 0.0, %v1747
    %v1749 = vpop.f32.mrf.mxu0
    %1750 = vmatprep.mubr.bf16.mxu0 0
    %1751 = vmatmul.mubr.bf16.gmra.mxu0 %v286
    %v1752 = vpop.f32.mrf.mxu0
    %v1753 = vadd.f32 0.0, %v1752
    %v1754 = vpop.f32.mrf.mxu0
    %v1755 = vpop.f32.mrf.mxu0
    %v1756 = vadd.f32 0.0, %v1755
    %v1757 = vpop.f32.mrf.mxu0
    %1758 = vmatprep.mubr.bf16.mxu0 0
    %1759 = vmatmul.mubr.bf16.gmra.mxu0 %v287
    %v1760 = vpop.f32.mrf.mxu0
    %v1761 = vadd.f32 0.0, %v1760
    %v1762 = vpop.f32.mrf.mxu0
    %v1763 = vpop.f32.mrf.mxu0
    %v1764 = vadd.f32 0.0, %v1763
    %v1765 = vpop.f32.mrf.mxu0
    %1766 = vdwg.mxu0
    %v1767 = vpack.c.bf16 %v1708, %v1705
    %v1768 = vpack.c.bf16 %v1716, %v1713
    %v1769 = vpack.c.bf16 %v1724, %v1721
    %v1770 = vpack.c.bf16 %v1732, %v1729
    %v1771 = vpack.c.bf16 %v1740, %v1737
    %v1772 = vpack.c.bf16 %v1748, %v1745
    %v1773 = vpack.c.bf16 %v1756, %v1753
    %v1774 = vpack.c.bf16 %v1764, %v1761
    %v1775 = vld [vmem:[#allocation14] sm:$0xff]
    %v1776 = vld [vmem:[#allocation14 + $0x8] sm:$0xff]
    %v1777 = vld [vmem:[#allocation14 + $0x10] sm:$0xff]
    %v1778 = vld [vmem:[#allocation14 + $0x18] sm:$0xff]
    %v1779 = vld [vmem:[#allocation14 + $0x20] sm:$0xff]
    %v1780 = vld [vmem:[#allocation14 + $0x28] sm:$0xff]
    %v1781 = vld [vmem:[#allocation14 + $0x30] sm:$0xff]
    %v1782 = vld [vmem:[#allocation14 + $0x38] sm:$0xff]
    %v1783 = vld [vmem:[#allocation14 + $0x40] sm:$0xff]
    %v1784 = vld [vmem:[#allocation14 + $0x48] sm:$0xff]
    %v1785 = vld [vmem:[#allocation14 + $0x50] sm:$0xff]
    %v1786 = vld [vmem:[#allocation14 + $0x58] sm:$0xff]
    %v1787 = vld [vmem:[#allocation14 + $0x60] sm:$0xff]
    %v1788 = vld [vmem:[#allocation14 + $0x68] sm:$0xff]
    %v1789 = vld [vmem:[#allocation14 + $0x70] sm:$0xff]
    %v1790 = vld [vmem:[#allocation14 + $0x78] sm:$0xff]
    %v1791 = vld [vmem:[%s18] sm:$0x3]
    %v1793 = vlaneseq
    %v1794 = vshrl.u32 %v1793, 7
    %v1795 = vsub.s32 0, %v1794
    %v1796 = vrot.slane %v1791, %v1795
    %v1797 = vlaneseq
    %v1798 = vshrl.u32 %v1797, 7
    %v1799 = vsub.s32 1, %v1798
    %v1800 = vrot.slane %v1791, %v1799
    %v1819 = vunpack.c.l.b16 %v1775
    %v1820 = vunpack.c.h.b16 %v1775
    %v1821 = vunpack.c.l.b16 %v1776
    %v1822 = vunpack.c.h.b16 %v1776
    %v1823 = vunpack.c.l.b16 %v1777
    %v1824 = vunpack.c.h.b16 %v1777
    %v1825 = vunpack.c.l.b16 %v1778
    %v1826 = vunpack.c.h.b16 %v1778
    %v1827 = vunpack.c.l.b16 %v1779
    %v1828 = vunpack.c.h.b16 %v1779
    %v1829 = vunpack.c.l.b16 %v1780
    %v1830 = vunpack.c.h.b16 %v1780
    %v1831 = vunpack.c.l.b16 %v1781
    %v1832 = vunpack.c.h.b16 %v1781
    %v1833 = vunpack.c.l.b16 %v1782
    %v1834 = vunpack.c.h.b16 %v1782
    %v1835 = vunpack.c.l.b16 %v1783
    %v1836 = vunpack.c.h.b16 %v1783
    %v1837 = vunpack.c.l.b16 %v1784
    %v1838 = vunpack.c.h.b16 %v1784
    %v1839 = vunpack.c.l.b16 %v1785
    %v1840 = vunpack.c.h.b16 %v1785
    %v1841 = vunpack.c.l.b16 %v1786
    %v1842 = vunpack.c.h.b16 %v1786
    %v1843 = vunpack.c.l.b16 %v1787
    %v1844 = vunpack.c.h.b16 %v1787
    %v1845 = vunpack.c.l.b16 %v1788
    %v1846 = vunpack.c.h.b16 %v1788
    %v1847 = vunpack.c.l.b16 %v1789
    %v1848 = vunpack.c.h.b16 %v1789
    %v1849 = vunpack.c.l.b16 %v1790
    %v1850 = vunpack.c.h.b16 %v1790
    %v1851 = vpack.c.b16 %v1821, %v1819
    %v1852 = vpack.c.b16 %v1822, %v1820
    %v1853 = vpack.c.b16 %v1825, %v1823
    %v1854 = vpack.c.b16 %v1826, %v1824
    %v1855 = vpack.c.b16 %v1829, %v1827
    %v1856 = vpack.c.b16 %v1830, %v1828
    %v1857 = vpack.c.b16 %v1833, %v1831
    %v1858 = vpack.c.b16 %v1834, %v1832
    %v1859 = vpack.c.b16 %v1837, %v1835
    %v1860 = vpack.c.b16 %v1838, %v1836
    %v1861 = vpack.c.b16 %v1841, %v1839
    %v1862 = vpack.c.b16 %v1842, %v1840
    %v1863 = vpack.c.b16 %v1845, %v1843
    %v1864 = vpack.c.b16 %v1846, %v1844
    %v1865 = vpack.c.b16 %v1849, %v1847
    %v1866 = vpack.c.b16 %v1850, %v1848
    %1883 = vmatprep.subr.bf16.mxu0 %v1866
    %1884 = vmatpush1.bf16.msra.mxu0 %v1865
    %1885 = vmatprep.subr.bf16.mxu0 %v1864
    %1886 = vmatpush1.bf16.msra.mxu0 %v1863
    %1887 = vmatprep.subr.bf16.mxu0 %v1862
    %1888 = vmatpush1.bf16.msra.mxu0 %v1861
    %1889 = vmatprep.subr.bf16.mxu0 %v1860
    %1890 = vmatpush1.bf16.msra.mxu0 %v1859
    %1891 = vmatprep.subr.bf16.mxu0 %v1858
    %1892 = vmatpush1.bf16.msra.mxu0 %v1857
    %1893 = vmatprep.subr.bf16.mxu0 %v1856
    %1894 = vmatpush1.bf16.msra.mxu0 %v1855
    %1895 = vmatprep.subr.bf16.mxu0 %v1854
    %1896 = vmatpush1.bf16.msra.mxu0 %v1853
    %1897 = vmatprep.subr.bf16.mxu0 %v1852
    %1898 = vmatpush1.bf16.msra.mxu0 %v1851
    %1899 = vmatprep.subr.bf16.mxu0 0
    %1900 = vmatpush2.bf16.msra.mxu0 0
    %1901 = vmatprep.subr.bf16.mxu0 0
    %1902 = vmatpush2.bf16.msra.mxu0 0
    %1903 = vmatprep.subr.bf16.mxu0 0
    %1904 = vmatpush2.bf16.msra.mxu0 0
    %1905 = vmatprep.subr.bf16.mxu0 0
    %1906 = vmatpush2.bf16.msra.mxu0 0
    %1907 = vmatprep.subr.bf16.mxu0 0
    %1908 = vmatpush2.bf16.msra.mxu0 0
    %1909 = vmatprep.subr.bf16.mxu0 0
    %1910 = vmatpush2.bf16.msra.mxu0 0
    %1911 = vmatprep.subr.bf16.mxu0 0
    %1912 = vmatpush2.bf16.msra.mxu0 0
    %1913 = vmatprep.subr.bf16.mxu0 0
    %1914 = vmatpush2.bf16.msra.mxu0 0
    %1915 = vmatprep.mubr.bf16.mxu0 0
    %1916 = vmatmul.mubr.bf16.gmra.mxu0 %v1767
    %v1917 = vpop.f32.mrf.mxu0
    %v1918 = vadd.f32 %v1796, %v1917
    %v1919 = vpop.f32.mrf.mxu0
    %v1920 = vadd.f32 %v1800, %v1919
    %v1921 = vpop.f32.mrf.mxu0
    %v1922 = vadd.f32 %v1796, %v1921
    %v1923 = vpop.f32.mrf.mxu0
    %v1924 = vadd.f32 %v1800, %v1923
    %1925 = vmatprep.mubr.bf16.mxu0 0
    %1926 = vmatmul.mubr.bf16.gmra.mxu0 %v1768
    %v1927 = vpop.f32.mrf.mxu0
    %v1928 = vadd.f32 %v1796, %v1927
    %v1929 = vpop.f32.mrf.mxu0
    %v1930 = vadd.f32 %v1800, %v1929
    %v1931 = vpop.f32.mrf.mxu0
    %v1932 = vadd.f32 %v1796, %v1931
    %v1933 = vpop.f32.mrf.mxu0
    %v1934 = vadd.f32 %v1800, %v1933
    %1935 = vmatprep.mubr.bf16.mxu0 0
    %1936 = vmatmul.mubr.bf16.gmra.mxu0 %v1769
    %v1937 = vpop.f32.mrf.mxu0
    %v1938 = vadd.f32 %v1796, %v1937
    %v1939 = vpop.f32.mrf.mxu0
    %v1940 = vadd.f32 %v1800, %v1939
    %v1941 = vpop.f32.mrf.mxu0
    %v1942 = vadd.f32 %v1796, %v1941
    %v1943 = vpop.f32.mrf.mxu0
    %v1944 = vadd.f32 %v1800, %v1943
    %1945 = vmatprep.mubr.bf16.mxu0 0
    %1946 = vmatmul.mubr.bf16.gmra.mxu0 %v1770
    %v1947 = vpop.f32.mrf.mxu0
    %v1948 = vadd.f32 %v1796, %v1947
    %v1949 = vpop.f32.mrf.mxu0
    %v1950 = vadd.f32 %v1800, %v1949
    %v1951 = vpop.f32.mrf.mxu0
    %v1952 = vadd.f32 %v1796, %v1951
    %v1953 = vpop.f32.mrf.mxu0
    %v1954 = vadd.f32 %v1800, %v1953
    %1955 = vmatprep.mubr.bf16.mxu0 0
    %1956 = vmatmul.mubr.bf16.gmra.mxu0 %v1771
    %v1957 = vpop.f32.mrf.mxu0
    %v1958 = vadd.f32 %v1796, %v1957
    %v1959 = vpop.f32.mrf.mxu0
    %v1960 = vadd.f32 %v1800, %v1959
    %v1961 = vpop.f32.mrf.mxu0
    %v1962 = vadd.f32 %v1796, %v1961
    %v1963 = vpop.f32.mrf.mxu0
    %v1964 = vadd.f32 %v1800, %v1963
    %1965 = vmatprep.mubr.bf16.mxu0 0
    %1966 = vmatmul.mubr.bf16.gmra.mxu0 %v1772
    %v1967 = vpop.f32.mrf.mxu0
    %v1968 = vadd.f32 %v1796, %v1967
    %v1969 = vpop.f32.mrf.mxu0
    %v1970 = vadd.f32 %v1800, %v1969
    %v1971 = vpop.f32.mrf.mxu0
    %v1972 = vadd.f32 %v1796, %v1971
    %v1973 = vpop.f32.mrf.mxu0
    %v1974 = vadd.f32 %v1800, %v1973
    %1975 = vmatprep.mubr.bf16.mxu0 0
    %1976 = vmatmul.mubr.bf16.gmra.mxu0 %v1773
    %v1977 = vpop.f32.mrf.mxu0
    %v1978 = vadd.f32 %v1796, %v1977
    %v1979 = vpop.f32.mrf.mxu0
    %v1980 = vadd.f32 %v1800, %v1979
    %v1981 = vpop.f32.mrf.mxu0
    %v1982 = vadd.f32 %v1796, %v1981
    %v1983 = vpop.f32.mrf.mxu0
    %v1984 = vadd.f32 %v1800, %v1983
    %1985 = vmatprep.mubr.bf16.mxu0 0
    %1986 = vmatmul.mubr.bf16.gmra.mxu0 %v1774
    %v1987 = vpop.f32.mrf.mxu0
    %v1988 = vadd.f32 %v1796, %v1987
    %v1989 = vpop.f32.mrf.mxu0
    %v1990 = vadd.f32 %v1800, %v1989
    %v1991 = vpop.f32.mrf.mxu0
    %v1992 = vadd.f32 %v1796, %v1991
    %v1993 = vpop.f32.mrf.mxu0
    %v1994 = vadd.f32 %v1800, %v1993
    %1995 = vdwg.mxu0
    %v1996 = vmax.f32 %v1918, 0.0
    %v1997 = vmax.f32 %v1920, 0.0
    %v1998 = vmax.f32 %v1922, 0.0
    %v1999 = vmax.f32 %v1924, 0.0
    %v2000 = vmax.f32 %v1928, 0.0
    %v2001 = vmax.f32 %v1930, 0.0
    %v2002 = vmax.f32 %v1932, 0.0
    %v2003 = vmax.f32 %v1934, 0.0
    %v2004 = vmax.f32 %v1938, 0.0
    %v2005 = vmax.f32 %v1940, 0.0
    %v2006 = vmax.f32 %v1942, 0.0
    %v2007 = vmax.f32 %v1944, 0.0
    %v2008 = vmax.f32 %v1948, 0.0
    %v2009 = vmax.f32 %v1950, 0.0
    %v2010 = vmax.f32 %v1952, 0.0
    %v2011 = vmax.f32 %v1954, 0.0
    %v2012 = vmax.f32 %v1958, 0.0
    %v2013 = vmax.f32 %v1960, 0.0
    %v2014 = vmax.f32 %v1962, 0.0
    %v2015 = vmax.f32 %v1964, 0.0
    %v2016 = vmax.f32 %v1968, 0.0
    %v2017 = vmax.f32 %v1970, 0.0
    %v2018 = vmax.f32 %v1972, 0.0
    %v2019 = vmax.f32 %v1974, 0.0
    %v2020 = vmax.f32 %v1978, 0.0
    %v2021 = vmax.f32 %v1980, 0.0
    %v2022 = vmax.f32 %v1982, 0.0
    %v2023 = vmax.f32 %v1984, 0.0
    %v2024 = vmax.f32 %v1988, 0.0
    %v2025 = vmax.f32 %v1990, 0.0
    %v2026 = vmax.f32 %v1992, 0.0
    %v2027 = vmax.f32 %v1994, 0.0
    %v2028 = vld [vmem:[%s19] sm:$0x3]
    %v2030 = vlaneseq
    %v2031 = vshrl.u32 %v2030, 7
    %v2032 = vsub.s32 0, %v2031
    %v2033 = vrot.slane %v2028, %v2032
    %v2034 = vlaneseq
    %v2035 = vshrl.u32 %v2034, 7
    %v2036 = vsub.s32 1, %v2035
    %v2037 = vrot.slane %v2028, %v2036
    %v2040 = vmul.f32 %v1996, %v2033
    %v2041 = vmul.f32 %v1997, %v2037
    %v2042 = vmul.f32 %v1998, %v2033
    %v2043 = vmul.f32 %v1999, %v2037
    %v2044 = vmul.f32 %v2000, %v2033
    %v2045 = vmul.f32 %v2001, %v2037
    %v2046 = vmul.f32 %v2002, %v2033
    %v2047 = vmul.f32 %v2003, %v2037
    %v2048 = vmul.f32 %v2004, %v2033
    %v2049 = vmul.f32 %v2005, %v2037
    %v2050 = vmul.f32 %v2006, %v2033
    %v2051 = vmul.f32 %v2007, %v2037
    %v2052 = vmul.f32 %v2008, %v2033
    %v2053 = vmul.f32 %v2009, %v2037
    %v2054 = vmul.f32 %v2010, %v2033
    %v2055 = vmul.f32 %v2011, %v2037
    %v2056 = vmul.f32 %v2012, %v2033
    %v2057 = vmul.f32 %v2013, %v2037
    %v2058 = vmul.f32 %v2014, %v2033
    %v2059 = vmul.f32 %v2015, %v2037
    %v2060 = vmul.f32 %v2016, %v2033
    %v2061 = vmul.f32 %v2017, %v2037
    %v2062 = vmul.f32 %v2018, %v2033
    %v2063 = vmul.f32 %v2019, %v2037
    %v2064 = vmul.f32 %v2020, %v2033
    %v2065 = vmul.f32 %v2021, %v2037
    %v2066 = vmul.f32 %v2022, %v2033
    %v2067 = vmul.f32 %v2023, %v2037
    %v2068 = vmul.f32 %v2024, %v2033
    %v2069 = vmul.f32 %v2025, %v2037
    %v2070 = vmul.f32 %v2026, %v2033
    %v2071 = vmul.f32 %v2027, %v2037
    %v2072 = vld [vmem:[%s20] sm:$0x3]
    %v2074 = vlaneseq
    %v2075 = vshrl.u32 %v2074, 7
    %v2076 = vsub.s32 0, %v2075
    %v2077 = vrot.slane %v2072, %v2076
    %v2078 = vlaneseq
    %v2079 = vshrl.u32 %v2078, 7
    %v2080 = vsub.s32 1, %v2079
    %v2081 = vrot.slane %v2072, %v2080
    %v2084 = vadd.f32 %v2040, %v2077
    %v2085 = vadd.f32 %v2041, %v2081
    %v2086 = vadd.f32 %v2042, %v2077
    %v2087 = vadd.f32 %v2043, %v2081
    %v2088 = vadd.f32 %v2044, %v2077
    %v2089 = vadd.f32 %v2045, %v2081
    %v2090 = vadd.f32 %v2046, %v2077
    %v2091 = vadd.f32 %v2047, %v2081
    %v2092 = vadd.f32 %v2048, %v2077
    %v2093 = vadd.f32 %v2049, %v2081
    %v2094 = vadd.f32 %v2050, %v2077
    %v2095 = vadd.f32 %v2051, %v2081
    %v2096 = vadd.f32 %v2052, %v2077
    %v2097 = vadd.f32 %v2053, %v2081
    %v2098 = vadd.f32 %v2054, %v2077
    %v2099 = vadd.f32 %v2055, %v2081
    %v2100 = vadd.f32 %v2056, %v2077
    %v2101 = vadd.f32 %v2057, %v2081
    %v2102 = vadd.f32 %v2058, %v2077
    %v2103 = vadd.f32 %v2059, %v2081
    %v2104 = vadd.f32 %v2060, %v2077
    %v2105 = vadd.f32 %v2061, %v2081
    %v2106 = vadd.f32 %v2062, %v2077
    %v2107 = vadd.f32 %v2063, %v2081
    %v2108 = vadd.f32 %v2064, %v2077
    %v2109 = vadd.f32 %v2065, %v2081
    %v2110 = vadd.f32 %v2066, %v2077
    %v2111 = vadd.f32 %v2067, %v2081
    %v2112 = vadd.f32 %v2068, %v2077
    %v2113 = vadd.f32 %v2069, %v2081
    %v2114 = vadd.f32 %v2070, %v2077
    %v2115 = vadd.f32 %v2071, %v2081
    %v2116 = vpack.c.bf16 %v2086, %v2084
    %v2117 = vpack.c.bf16 %v2087, %v2085
    %v2118 = vpack.c.bf16 %v2090, %v2088
    %v2119 = vpack.c.bf16 %v2091, %v2089
    %v2120 = vpack.c.bf16 %v2094, %v2092
    %v2121 = vpack.c.bf16 %v2095, %v2093
    %v2122 = vpack.c.bf16 %v2098, %v2096
    %v2123 = vpack.c.bf16 %v2099, %v2097
    %v2124 = vpack.c.bf16 %v2102, %v2100
    %v2125 = vpack.c.bf16 %v2103, %v2101
    %v2126 = vpack.c.bf16 %v2106, %v2104
    %v2127 = vpack.c.bf16 %v2107, %v2105
    %v2128 = vpack.c.bf16 %v2110, %v2108
    %v2129 = vpack.c.bf16 %v2111, %v2109
    %v2130 = vpack.c.bf16 %v2114, %v2112
    %v2131 = vpack.c.bf16 %v2115, %v2113
    %v2132 = vld [vmem:[#allocation7] sm:$0xf]
    %2133 = vmatprep.subr.bf16.mxu0 %v2131
    %2134 = vmatpush1.bf16.msra.mxu0 %v2130
    %2135 = vmatprep.subr.bf16.mxu0 %v2129
    %2136 = vmatpush1.bf16.msra.mxu0 %v2128
    %2137 = vmatprep.subr.bf16.mxu0 %v2127
    %2138 = vmatpush1.bf16.msra.mxu0 %v2126
    %2139 = vmatprep.subr.bf16.mxu0 %v2125
    %2140 = vmatpush1.bf16.msra.mxu0 %v2124
    %2141 = vmatprep.subr.bf16.mxu0 %v2123
    %2142 = vmatpush1.bf16.msra.mxu0 %v2122
    %2143 = vmatprep.subr.bf16.mxu0 %v2121
    %2144 = vmatpush1.bf16.msra.mxu0 %v2120
    %2145 = vmatprep.subr.bf16.mxu0 %v2119
    %2146 = vmatpush1.bf16.msra.mxu0 %v2118
    %2147 = vmatprep.subr.bf16.mxu0 %v2117
    %2148 = vmatpush1.bf16.msra.mxu0 %v2116
    %2149 = vmatprep.subr.bf16.mxu0 0
    %2150 = vmatpush2.bf16.msra.mxu0 0
    %2151 = vmatprep.subr.bf16.mxu0 0
    %2152 = vmatpush2.bf16.msra.mxu0 0
    %2153 = vmatprep.subr.bf16.mxu0 0
    %2154 = vmatpush2.bf16.msra.mxu0 0
    %2155 = vmatprep.subr.bf16.mxu0 0
    %2156 = vmatpush2.bf16.msra.mxu0 0
    %2157 = vmatprep.subr.bf16.mxu0 0
    %2158 = vmatpush2.bf16.msra.mxu0 0
    %2159 = vmatprep.subr.bf16.mxu0 0
    %2160 = vmatpush2.bf16.msra.mxu0 0
    %2161 = vmatprep.subr.bf16.mxu0 0
    %2162 = vmatpush2.bf16.msra.mxu0 0
    %2163 = vmatprep.subr.bf16.mxu0 0
    %2164 = vmatpush2.bf16.msra.mxu0 0
    %2165 = vmatprep.mubr.bf16.mxu0 0
    %2166 = vmatmul.mubr.bf16.gmra.mxu0 %v2132
    %v2167 = vpop.f32.mrf.mxu0
    %v2168 = vadd.f32 0.0, %v2167
    %v2169 = vpop.f32.mrf.mxu0
    %v2170 = vadd.f32 0.0, %v2169
    %v2171 = vpop.f32.mrf.mxu0
    %v2172 = vpop.f32.mrf.mxu0
    %2173 = vdwg.mxu0
    %v2174 = vmax.f32 %v2168, 0.0
    %v2175 = vmax.f32 %v2170, 0.0
    %v2176 = vpack.c.bf16 %v2174, %v2174
    %v2177 = vpack.c.bf16 %v2175, %v2175
    %v2178 = vld [vmem:[#allocation16] sm:$0xf]
    %v2179 = vld [vmem:[#allocation16 + $0x4] sm:$0xf]
    %v2180 = vld [vmem:[#allocation16 + $0x8] sm:$0xf]
    %v2181 = vld [vmem:[#allocation16 + $0xc] sm:$0xf]
    %v2182 = vld [vmem:[#allocation16 + $0x10] sm:$0xf]
    %v2183 = vld [vmem:[#allocation16 + $0x14] sm:$0xf]
    %v2184 = vld [vmem:[#allocation16 + $0x18] sm:$0xf]
    %v2185 = vld [vmem:[#allocation16 + $0x1c] sm:$0xf]
    %v2186 = vld [vmem:[#allocation16 + $0x20] sm:$0xf]
    %v2187 = vld [vmem:[#allocation16 + $0x24] sm:$0xf]
    %v2188 = vld [vmem:[#allocation16 + $0x28] sm:$0xf]
    %v2189 = vld [vmem:[#allocation16 + $0x2c] sm:$0xf]
    %v2190 = vld [vmem:[#allocation16 + $0x30] sm:$0xf]
    %v2191 = vld [vmem:[#allocation16 + $0x34] sm:$0xf]
    %v2192 = vld [vmem:[#allocation16 + $0x38] sm:$0xf]
    %v2193 = vld [vmem:[#allocation16 + $0x3c] sm:$0xf]
    %v2194 = vld [vmem:[#allocation16 + $0x40] sm:$0xf]
    %v2195 = vld [vmem:[#allocation16 + $0x44] sm:$0xf]
    %v2196 = vld [vmem:[#allocation16 + $0x48] sm:$0xf]
    %v2197 = vld [vmem:[#allocation16 + $0x4c] sm:$0xf]
    %v2198 = vld [vmem:[#allocation16 + $0x50] sm:$0xf]
    %v2199 = vld [vmem:[#allocation16 + $0x54] sm:$0xf]
    %v2200 = vld [vmem:[#allocation16 + $0x58] sm:$0xf]
    %v2201 = vld [vmem:[#allocation16 + $0x5c] sm:$0xf]
    %v2202 = vld [vmem:[#allocation16 + $0x60] sm:$0xf]
    %v2203 = vld [vmem:[#allocation16 + $0x64] sm:$0xf]
    %v2204 = vld [vmem:[#allocation16 + $0x68] sm:$0xf]
    %v2205 = vld [vmem:[#allocation16 + $0x6c] sm:$0xf]
    %v2206 = vld [vmem:[#allocation16 + $0x70] sm:$0xf]
    %v2207 = vld [vmem:[#allocation16 + $0x74] sm:$0xf]
    %v2208 = vld [vmem:[#allocation16 + $0x78] sm:$0xf]
    %v2209 = vld [vmem:[#allocation16 + $0x7c] sm:$0xf]
    %v2210 = vld [vmem:[%s22] sm:$0x1]
    %v2212 = vlaneseq
    %v2213 = vshrl.u32 %v2212, 7
    %v2214 = vsub.s32 0, %v2213
    %v2215 = vrot.slane %v2210, %v2214
    %v2249 = vunpack.c.l.b16 %v2178
    %v2250 = vunpack.c.l.b16 %v2179
    %v2251 = vunpack.c.l.b16 %v2180
    %v2252 = vunpack.c.l.b16 %v2181
    %v2253 = vunpack.c.l.b16 %v2182
    %v2254 = vunpack.c.l.b16 %v2183
    %v2255 = vunpack.c.l.b16 %v2184
    %v2256 = vunpack.c.l.b16 %v2185
    %v2257 = vunpack.c.l.b16 %v2186
    %v2258 = vunpack.c.l.b16 %v2187
    %v2259 = vunpack.c.l.b16 %v2188
    %v2260 = vunpack.c.l.b16 %v2189
    %v2261 = vunpack.c.l.b16 %v2190
    %v2262 = vunpack.c.l.b16 %v2191
    %v2263 = vunpack.c.l.b16 %v2192
    %v2264 = vunpack.c.l.b16 %v2193
    %v2265 = vunpack.c.l.b16 %v2194
    %v2266 = vunpack.c.l.b16 %v2195
    %v2267 = vunpack.c.l.b16 %v2196
    %v2268 = vunpack.c.l.b16 %v2197
    %v2269 = vunpack.c.l.b16 %v2198
    %v2270 = vunpack.c.l.b16 %v2199
    %v2271 = vunpack.c.l.b16 %v2200
    %v2272 = vunpack.c.l.b16 %v2201
    %v2273 = vunpack.c.l.b16 %v2202
    %v2274 = vunpack.c.l.b16 %v2203
    %v2275 = vunpack.c.l.b16 %v2204
    %v2276 = vunpack.c.l.b16 %v2205
    %v2277 = vunpack.c.l.b16 %v2206
    %v2278 = vunpack.c.l.b16 %v2207
    %v2279 = vunpack.c.l.b16 %v2208
    %v2280 = vunpack.c.l.b16 %v2209
    %v2281 = vpack.c.b16 %v2250, %v2249
    %v2282 = vpack.c.b16 %v2252, %v2251
    %v2283 = vpack.c.b16 %v2254, %v2253
    %v2284 = vpack.c.b16 %v2256, %v2255
    %v2285 = vpack.c.b16 %v2258, %v2257
    %v2286 = vpack.c.b16 %v2260, %v2259
    %v2287 = vpack.c.b16 %v2262, %v2261
    %v2288 = vpack.c.b16 %v2264, %v2263
    %v2289 = vpack.c.b16 %v2266, %v2265
    %v2290 = vpack.c.b16 %v2268, %v2267
    %v2291 = vpack.c.b16 %v2270, %v2269
    %v2292 = vpack.c.b16 %v2272, %v2271
    %v2293 = vpack.c.b16 %v2274, %v2273
    %v2294 = vpack.c.b16 %v2276, %v2275
    %v2295 = vpack.c.b16 %v2278, %v2277
    %v2296 = vpack.c.b16 %v2280, %v2279
    %2313 = vmatprep.subr.bf16.mxu0 0
    %2314 = vmatpush1.bf16.msra.mxu0 %v2288
    %2315 = vmatprep.subr.bf16.mxu0 0
    %2316 = vmatpush1.bf16.msra.mxu0 %v2287
    %2317 = vmatprep.subr.bf16.mxu0 0
    %2318 = vmatpush1.bf16.msra.mxu0 %v2286
    %2319 = vmatprep.subr.bf16.mxu0 0
    %2320 = vmatpush1.bf16.msra.mxu0 %v2285
    %2321 = vmatprep.subr.bf16.mxu0 0
    %2322 = vmatpush1.bf16.msra.mxu0 %v2284
    %2323 = vmatprep.subr.bf16.mxu0 0
    %2324 = vmatpush1.bf16.msra.mxu0 %v2283
    %2325 = vmatprep.subr.bf16.mxu0 0
    %2326 = vmatpush1.bf16.msra.mxu0 %v2282
    %2327 = vmatprep.subr.bf16.mxu0 0
    %2328 = vmatpush1.bf16.msra.mxu0 %v2281
    %2329 = vmatprep.subr.bf16.mxu0 0
    %2330 = vmatpush2.bf16.msra.mxu0 %v2296
    %2331 = vmatprep.subr.bf16.mxu0 0
    %2332 = vmatpush2.bf16.msra.mxu0 %v2295
    %2333 = vmatprep.subr.bf16.mxu0 0
    %2334 = vmatpush2.bf16.msra.mxu0 %v2294
    %2335 = vmatprep.subr.bf16.mxu0 0
    %2336 = vmatpush2.bf16.msra.mxu0 %v2293
    %2337 = vmatprep.subr.bf16.mxu0 0
    %2338 = vmatpush2.bf16.msra.mxu0 %v2292
    %2339 = vmatprep.subr.bf16.mxu0 0
    %2340 = vmatpush2.bf16.msra.mxu0 %v2291
    %2341 = vmatprep.subr.bf16.mxu0 0
    %2342 = vmatpush2.bf16.msra.mxu0 %v2290
    %2343 = vmatprep.subr.bf16.mxu0 0
    %2344 = vmatpush2.bf16.msra.mxu0 %v2289
    %2345 = vmatprep.mubr.bf16.mxu0 %v2177
    %2346 = vmatmul.mubr.bf16.gmra.mxu0 %v2176
    %v2347 = vpop.f32.mrf.mxu0
    %v2348 = vadd.f32 %v2215, %v2347
    %v2349 = vpop.f32.mrf.mxu0
    %v2350 = vpop.f32.mrf.mxu0
    %v2351 = vpop.f32.mrf.mxu0
    %2352 = vdwg.mxu0
    %v2353 = vmax.f32 %v2348, 0.0
    %v2354 = vpack.c.bf16 %v2353, %v2353
    %v2355 = vld [vmem:[#allocation17] sm:$0xf]
    %v2356 = vld [vmem:[#allocation17 + $0x4] sm:$0xf]
    %v2357 = vld [vmem:[#allocation17 + $0x8] sm:$0xf]
    %v2358 = vld [vmem:[#allocation17 + $0xc] sm:$0xf]
    %v2359 = vld [vmem:[#allocation17 + $0x10] sm:$0xf]
    %v2360 = vld [vmem:[#allocation17 + $0x14] sm:$0xf]
    %v2361 = vld [vmem:[#allocation17 + $0x18] sm:$0xf]
    %v2362 = vld [vmem:[#allocation17 + $0x1c] sm:$0xf]
    %v2363 = vld [vmem:[#allocation17 + $0x20] sm:$0xf]
    %v2364 = vld [vmem:[#allocation17 + $0x24] sm:$0xf]
    %v2365 = vld [vmem:[#allocation17 + $0x28] sm:$0xf]
    %v2366 = vld [vmem:[#allocation17 + $0x2c] sm:$0xf]
    %v2367 = vld [vmem:[#allocation17 + $0x30] sm:$0xf]
    %v2368 = vld [vmem:[#allocation17 + $0x34] sm:$0xf]
    %v2369 = vld [vmem:[#allocation17 + $0x38] sm:$0xf]
    %v2370 = vld [vmem:[#allocation17 + $0x3c] sm:$0xf]
    %v2371 = vld [vmem:[%s24] sm:$0x1]
    %v2373 = vlaneseq
    %v2374 = vshrl.u32 %v2373, 7
    %v2375 = vsub.s32 0, %v2374
    %v2376 = vrot.slane %v2371, %v2375
    %v2394 = vunpack.c.l.b16 %v2355
    %v2395 = vunpack.c.l.b16 %v2356
    %v2396 = vunpack.c.l.b16 %v2357
    %v2397 = vunpack.c.l.b16 %v2358
    %v2398 = vunpack.c.l.b16 %v2359
    %v2399 = vunpack.c.l.b16 %v2360
    %v2400 = vunpack.c.l.b16 %v2361
    %v2401 = vunpack.c.l.b16 %v2362
    %v2402 = vunpack.c.l.b16 %v2363
    %v2403 = vunpack.c.l.b16 %v2364
    %v2404 = vunpack.c.l.b16 %v2365
    %v2405 = vunpack.c.l.b16 %v2366
    %v2406 = vunpack.c.l.b16 %v2367
    %v2407 = vunpack.c.l.b16 %v2368
    %v2408 = vunpack.c.l.b16 %v2369
    %v2409 = vunpack.c.l.b16 %v2370
    %v2410 = vpack.c.b16 %v2395, %v2394
    %v2411 = vpack.c.b16 %v2397, %v2396
    %v2412 = vpack.c.b16 %v2399, %v2398
    %v2413 = vpack.c.b16 %v2401, %v2400
    %v2414 = vpack.c.b16 %v2403, %v2402
    %v2415 = vpack.c.b16 %v2405, %v2404
    %v2416 = vpack.c.b16 %v2407, %v2406
    %v2417 = vpack.c.b16 %v2409, %v2408
    %2426 = vmatprep.subr.bf16.mxu0 0
    %2427 = vmatpush1.bf16.msra.mxu0 %v2417
    %2428 = vmatprep.subr.bf16.mxu0 0
    %2429 = vmatpush1.bf16.msra.mxu0 %v2416
    %2430 = vmatprep.subr.bf16.mxu0 0
    %2431 = vmatpush1.bf16.msra.mxu0 %v2415
    %2432 = vmatprep.subr.bf16.mxu0 0
    %2433 = vmatpush1.bf16.msra.mxu0 %v2414
    %2434 = vmatprep.subr.bf16.mxu0 0
    %2435 = vmatpush1.bf16.msra.mxu0 %v2413
    %2436 = vmatprep.subr.bf16.mxu0 0
    %2437 = vmatpush1.bf16.msra.mxu0 %v2412
    %2438 = vmatprep.subr.bf16.mxu0 0
    %2439 = vmatpush1.bf16.msra.mxu0 %v2411
    %2440 = vmatprep.subr.bf16.mxu0 0
    %2441 = vmatpush1.bf16.msra.mxu0 %v2410
    %2442 = vmatprep.subr.bf16.mxu0 0
    %2443 = vmatpush2.bf16.msra.mxu0 0
    %2444 = vmatprep.subr.bf16.mxu0 0
    %2445 = vmatpush2.bf16.msra.mxu0 0
    %2446 = vmatprep.subr.bf16.mxu0 0
    %2447 = vmatpush2.bf16.msra.mxu0 0
    %2448 = vmatprep.subr.bf16.mxu0 0
    %2449 = vmatpush2.bf16.msra.mxu0 0
    %2450 = vmatprep.subr.bf16.mxu0 0
    %2451 = vmatpush2.bf16.msra.mxu0 0
    %2452 = vmatprep.subr.bf16.mxu0 0
    %2453 = vmatpush2.bf16.msra.mxu0 0
    %2454 = vmatprep.subr.bf16.mxu0 0
    %2455 = vmatpush2.bf16.msra.mxu0 0
    %2456 = vmatprep.subr.bf16.mxu0 0
    %2457 = vmatpush2.bf16.msra.mxu0 0
    %2458 = vmatprep.mubr.bf16.mxu0 0
    %2459 = vmatmul.mubr.bf16.gmra.mxu0 %v2354
    %v2460 = vpop.f32.mrf.mxu0
    %v2461 = vadd.f32 %v2376, %v2460
    %v2462 = vpop.f32.mrf.mxu0
    %v2463 = vpop.f32.mrf.mxu0
    %v2464 = vpop.f32.mrf.mxu0
    %2465 = vdwg.mxu0
    %2466 = vst [vmem:[#allocation19] sm:$0xff] %v2461
    // Predicated region
    $region142: #{tpu_custom_call.1} parent=1 // pred_check
      _
    $region143: #{tpu_custom_call.1} parent=1 // pred_check_branch
      %2468 = sbr.rel (0) target = $region145
    $region144: #{tpu_custom_call.1} parent=1 // pred_region
      %s2470 = ssub.s32 128, 128
      %2471 = vsyncadd [#allocation4], %s2470
      %s2473 = sshll.u32 [#allocation19], 4
      %s2474 = int_to_ptr.vmem [resolvable:$true] %s2473
      %2476 = dma.vmem_to_hbm [thread:$0]  %s2474, 128, %s25, [#allocation4]
    $region145: #{tpu_custom_call.1} parent=1 // pred_fallthru
      _
    // Predicated region
    $region146: #{tpu_custom_call.1} parent=1 // pred_check
      _
    $region147: #{tpu_custom_call.1} parent=1 // pred_check_branch
      %2478 = sbr.rel (0) target = $region149
    $region148: #{tpu_custom_call.1} parent=1 // pred_region
      %2479 = dma.done [#allocation4], 128
    $region149: #{tpu_custom_call.1} parent=1 // pred_fallthru
      _
    %2480 = vsyncpa [#allocation3], 1
    %2481 = vsyncpa [#allocation6], 1
    %2482 = vsyncpa [#allocation9], 1
    %2483 = vsyncpa [#allocation12], 1
    %2484 = vsyncpa [#allocation15], 1
    %2485 = vsyncpa [#allocation18], 1
    %2486 = vsyncpa [#allocation4], 1

</llo_original>
